<compile_context>
chip_gen: v7x
topology: tpu7x:2x2x1
jax: 0.10.0
libtpu: 0.0.40
codegen_flags: <defaults>
</compile_context>

<pallas_src>
import numpy as np
import jax
import jax.numpy as jnp
from jax import lax
from jax.experimental import pallas as pl
from jax.experimental.pallas import tpu as pltpu


PROJECT_INS = (8, 16, 32, 32)     # backbone.project_ins
NUM_CLASSES = 10


# ------------------------- constant helper matrices -------------------------

def _avgpool2_matrix(h, w):
    """Batch-shared (h*w, (h//2)*(w//2)) matrix: X_flat @ P == 2x2 avg pool."""
    ho, wo = h // 2, w // 2
    p = np.zeros((h * w, ho * wo), dtype=np.float32)
    for i in range(ho):
        for j in range(wo):
            q = i * wo + j
            for dh in range(2):
                for dw in range(2):
                    p[(2 * i + dh) * w + (2 * j + dw), q] = 0.25
    return jnp.asarray(p)


def _pack_slab(entries):
    """Pack 2-D tensors into one lane-dense (rows, 128) slab.

    Each entry is zero-padded to 128 lanes and a multiple of 8 sublanes so
    every in-kernel slice starts at an aligned sublane offset."""
    blocks, offsets, row = [], {}, 0
    for name, arr in entries:
        arr = jnp.asarray(arr, jnp.float32)
        r, c = arr.shape
        rp = ((r + 7) // 8) * 8
        block = jnp.zeros((rp, 128), jnp.float32).at[:r, :c].set(arr)
        offsets[name] = (row, r, c)
        blocks.append(block)
        row += rp
    return jnp.concatenate(blocks, axis=0), offsets


# ----------------------------- Pallas kernel -------------------------------

def _make_kernel(off, out_lanes):
    attn_r0, _, attn_c = off["attn_wT"]

    def W(w_ref, name):
        r0, r, c = off[name]
        return w_ref[pl.ds(r0, r), pl.ds(0, c)]

    def kernel(x_ref, w_ref, out_ref):
        f32 = jnp.float32
        mm = lambda a, b: jnp.dot(a, b, preferred_element_type=f32)
        relu = lambda t: jnp.maximum(t, 0.0)

        x = x_ref[0]                                         # (Cin, HW0)

        # ---- synthetic backbone: 1x1 convs + 2x2 avg pools (per batch) -----
        # TODO(synk): ResNetN definition not provided; deterministic 1x1-conv
        #             + 2x2 avg-pool stand-in matching project_ins channels.
        l0 = relu(mm(W(w_ref, "bconv0"), x))                              # (8,  HW0)
        l1 = relu(mm(W(w_ref, "bconv1"), mm(l0, W(w_ref, "pool0"))))      # (16, HW1)
        l2 = relu(mm(W(w_ref, "bconv2"), mm(l1, W(w_ref, "pool1"))))      # (32, HW2)
        l3 = relu(mm(W(w_ref, "bconv3"), mm(l2, W(w_ref, "pool2"))))      # (32, HW3)
        g = jnp.mean(l3, axis=1, keepdims=True)                           # (32, 1)

        # ---- projectors (levels whose channels != project_ins[-1]) ---------
        f0 = mm(W(w_ref, "proj0"), l0)                                    # (32, HW0)
        f1 = mm(W(w_ref, "proj1"), l1)                                    # (32, HW1)
        feats = (f0, f1, l2, l3)

        c_rows, gouts = [], []
        for i, f in enumerate(feats):
            # per-level 1x1-conv weight row, loaded straight from the slab
            w_row = w_ref[pl.ds(attn_r0 + i, 1), pl.ds(0, attn_c)]        # (1, 32)

            # attention scores on the MXU; the +w·g shift is softmax-invariant
            scores = mm(w_row, f)                                         # (1, hw)
            m = jnp.max(scores, axis=1, keepdims=True)
            e = jnp.exp(scores - m)
            a = e / jnp.sum(e, axis=1, keepdims=True)                     # (1, hw)

            # weighted channel sum on the MXU: contract over spatial positions
            gout = lax.dot_general(a, f,
                                   dimension_numbers=(((1,), (1,)), ((), ())),
                                   preferred_element_type=f32)            # (1, 32)
            gouts.append(gout)

            # raw score map (includes the per-batch global term w·g)
            c_rows.append(scores + mm(w_row, g))                          # (1, hw)

        g_cat = jnp.concatenate(gouts, axis=1)                            # (1, 128)
        h = relu(mm(g_cat, W(w_ref, "fc1_w")) + W(w_ref, "fc1_b"))        # (1, 32)
        # TODO(synk): dropout_mode='dropout' is identity at inference (eval).
        logits = mm(h, W(w_ref, "cls_w")) + W(w_ref, "cls_b")             # (1, 128)

        # ---- pack everything into one lane-dense tile; single full store ---
        def pad_lanes(v):
            k = v.shape[-1]
            if k == out_lanes:
                return v
            return jnp.concatenate(
                [v, jnp.zeros((v.shape[0], out_lanes - k), f32)], axis=1)

        tile = jnp.concatenate(
            [pad_lanes(logits)]
            + [pad_lanes(c) for c in c_rows]
            + [jnp.zeros((3, out_lanes), f32)], axis=0)                   # (8, out_lanes)
        out_ref[0] = tile

    return kernel


# ------------------------------ model glue ---------------------------------

def init_params(key):
    ks = jax.random.split(key, 11)

    def w(k, shape, scale=0.1):
        return (scale * jax.random.normal(k, shape)).astype(jnp.float32)

    C = PROJECT_INS[-1]
    return {
        # synthetic backbone 1x1 conv weights, stored (Cout, Cin)
        "bconv0": w(ks[0], (PROJECT_INS[0], 3)),
        "bconv1": w(ks[1], (PROJECT_INS[1], PROJECT_INS[0])),
        "bconv2": w(ks[2], (PROJECT_INS[2], PROJECT_INS[1])),
        "bconv3": w(ks[3], (PROJECT_INS[3], PROJECT_INS[2])),
        # projectors only where project_ins[i] != project_ins[-1] (levels 0, 1)
        "proj0": w(ks[4], (C, PROJECT_INS[0])),
        "proj1": w(ks[5], (C, PROJECT_INS[1])),
        # four spatial-attention 1x1 convs (C -> 1, no bias); one column/level
        "attn_w": w(ks[6], (C, 4)),
        # heads
        "fc1_w": w(ks[7], (4 * C, C)),
        "fc1_b": w(ks[8], (1, C)),
        "cls_w": w(ks[9], (C, NUM_CLASSES)),
        "cls_b": w(ks[10], (1, NUM_CLASSES)),
    }


def attn_resnet_forward(params, x_nchw):
    """AttnResNet.forward (attention=True, normalize_attn=True).

    Returns [out, c0, c1, c2, c3] like the PyTorch module
    (attention maps shaped (N, 1, H_i, W_i))."""
    x = jnp.asarray(x_nchw, jnp.float32)
    n, cin, h, w = x.shape
    hw0 = h * w
    hw_sizes = [(h, w), (h // 2, w // 2), (h // 4, w // 4), (h // 8, w // 8)]
    out_lanes = ((max(128, hw0) + 127) // 128) * 128

    C = PROJECT_INS[-1]
    # lane-pad classifier to 128 output lanes (unmasked final store)
    cls_w_pad = jnp.zeros((C, 128), jnp.float32).at[:, :NUM_CLASSES].set(params["cls_w"])
    cls_b_pad = jnp.zeros((1, 128), jnp.float32).at[:, :NUM_CLASSES].set(params["cls_b"])

    entries = [
        ("bconv0", params["bconv0"]), ("bconv1", params["bconv1"]),
        ("bconv2", params["bconv2"]), ("bconv3", params["bconv3"]),
        ("proj0", params["proj0"]), ("proj1", params["proj1"]),
        ("attn_wT", params["attn_w"].T),
        ("fc1_w", params["fc1_w"]), ("fc1_b", params["fc1_b"]),
        ("cls_w", cls_w_pad), ("cls_b", cls_b_pad),
        # batch-shared 2x2 avg-pool matrices (no N-scaled dense constants)
        ("pool0", _avgpool2_matrix(h, w)),
        ("pool1", _avgpool2_matrix(h // 2, w // 2)),
        ("pool2", _avgpool2_matrix(h // 4, w // 4)),
    ]
    slab, off = _pack_slab(entries)

    kernel = _make_kernel(off, out_lanes)

    x_in = x.reshape(n, cin, hw0)      # per-batch channel-major, spatial on lanes

    packed = pl.pallas_call(
        kernel,
        grid=(n,),
        in_specs=[
            pl.BlockSpec((1, cin, hw0), lambda b: (b, 0, 0)),   # one batch / step
            pl.BlockSpec(slab.shape, lambda b: (0, 0)),         # resident weights
        ],
        out_specs=pl.BlockSpec((1, 8, out_lanes), lambda b: (b, 0, 0)),
        out_shape=jax.ShapeDtypeStruct((n, 8, out_lanes), jnp.float32),
        compiler_params=pltpu.CompilerParams(
            dimension_semantics=("parallel",),
            vmem_limit_bytes=32 * 1024 * 1024),
    )(x_in, slab)

    out = packed[:, 0, :NUM_CLASSES]
    attn_maps = [packed[:, 1 + i, :hh * ww].reshape(n, 1, hh, ww)
                 for i, (hh, ww) in enumerate(hw_sizes)]
    return [out] + attn_maps


# ------------------------- pure-JAX reference (check) -----------------------

def _reference_forward(params, x_nchw):
    hp = lax.Precision.HIGHEST
    x = jnp.asarray(x_nchw, jnp.float32)

    def conv1x1(t, w_oc):  # w: (Cout, Cin)
        return jnp.einsum("oc,nchw->nohw", w_oc, t, precision=hp)

    def pool2(t):
        nb, cb, hb, wb = t.shape
        return t.reshape(nb, cb, hb // 2, 2, wb // 2, 2).mean(axis=(3, 5))

    l0 = jax.nn.relu(conv1x1(x, params["bconv0"]))
    l1 = jax.nn.relu(conv1x1(pool2(l0), params["bconv1"]))
    l2 = jax.nn.relu(conv1x1(pool2(l1), params["bconv2"]))
    l3 = jax.nn.relu(conv1x1(pool2(l2), params["bconv3"]))
    g = l3.mean(axis=(2, 3))                                       # (N, C)

    feats = [conv1x1(l0, params["proj0"]), conv1x1(l1, params["proj1"]), l2, l3]
    cs, gs = [], []
    for i, f in enumerate(feats):
        nb, cb, hb, wb = f.shape
        s = f + g[:, :, None, None]
        wv = params["attn_w"][:, i]                                # (C,)
        c_map = jnp.einsum("c,nchw->nhw", wv, s, precision=hp)     # (N, H, W)
        a = jax.nn.softmax(c_map.reshape(nb, -1), axis=1)          # (N, HW)
        gi = jnp.einsum("np,ncp->nc", a, f.reshape(nb, cb, -1), precision=hp)
        cs.append(c_map[:, None, :, :])
        gs.append(gi)
    gcat = jnp.concatenate(gs, axis=1)
    hid = jax.nn.relu(gcat @ params["fc1_w"] + params["fc1_b"])
    out = hid @ params["cls_w"] + params["cls_b"]
    return [out] + cs


if __name__ == "__main__":
    key = jax.random.PRNGKey(0)
    pkey, xkey = jax.random.split(key)
    params = init_params(pkey)
    x = jax.random.normal(xkey, (2, 3, 16, 16), dtype=jnp.float32)  # NCHW input

    outs = jax.jit(attn_resnet_forward)(params, x)
    outs = jax.block_until_ready(outs)

    assert outs[0].shape == (2, NUM_CLASSES)
    assert outs[1].shape == (2, 1, 16, 16)
    assert outs[2].shape == (2, 1, 8, 8)
    assert outs[3].shape == (2, 1, 4, 4)
    assert outs[4].shape == (2, 1, 2, 2)
    for o in outs:
        assert bool(jnp.all(jnp.isfinite(o)))

    # correctness check against a pure-JAX reference (tolerant only of
    # MXU-vs-XLA matmul precision differences)
    refs = _reference_forward(params, x)
    for got, ref in zip(outs, refs):
        err = float(jnp.max(jnp.abs(got - ref)))
        scale = float(jnp.max(jnp.abs(ref))) + 1e-6
        assert err <= 2e-2 * scale + 1e-5, (err, scale)

    print("KERNEL_OK")
</pallas_src>

<mosaic_0001>
module attributes {stable_mosaic.version = 11 : i64} {
  func.func @kernel(%arg0: i32, %arg1: memref<1x3x256xf32, #tpu.memory_space<vmem>>, %arg2: memref<672x128xf32, #tpu.memory_space<vmem>>, %arg3: memref<1x8x256xf32, #tpu.memory_space<vmem>>) attributes {dimension_semantics = [#tpu.dimension_semantics<parallel>], iteration_bounds = array<i64: 2>, scalar_prefetch = 0 : i64, scratch_operands = 0 : i64, tpu.core_type = #tpu.core_type<tc>, window_params = [{transform_indices = @transform_0, window_bounds = array<i64: 1, 3, 256>}, {pipeline_mode = #tpu.pipeline_mode<synchronous>, transform_indices = @transform_1, window_bounds = array<i64: 672, 128>}, {transform_indices = @transform_2, window_bounds = array<i64: 1, 8, 256>}]} {
    %c0 = arith.constant 0 : index
    %c0_0 = arith.constant 0 : index
    %c0_1 = arith.constant 0 : index
    %0 = vector.load %arg1[%c0, %c0_0, %c0_1] : memref<1x3x256xf32, #tpu.memory_space<vmem>>, vector<1x3x256xf32>
    %1 = vector.shape_cast %0 : vector<1x3x256xf32> to vector<3x256xf32>
    %c0_2 = arith.constant 0 : index
    %c0_3 = arith.constant 0 : index
    %2 = vector.load %arg2[%c0_2, %c0_3] : memref<672x128xf32, #tpu.memory_space<vmem>>, vector<8x3xf32>
    %cst = arith.constant dense<0.000000e+00> : vector<8x256xf32>
    %3 = tpu.matmul %2, %1, %cst {dimension_numbers = #tpu.dot_dimension_numbers<[1], [0], [0], [1], [0, 0, 1, 1], [], []>} : vector<8x3xf32>, vector<3x256xf32>, vector<8x256xf32> -> vector<8x256xf32>
    %cst_4 = arith.constant 0.000000e+00 : f32
    %4 = vector.broadcast %cst_4 : f32 to vector<8x256xf32>
    %5 = arith.maximumf %3, %4 : vector<8x256xf32>
    %c8 = arith.constant 8 : index
    %c0_5 = arith.constant 0 : index
    %6 = vector.load %arg2[%c8, %c0_5] : memref<672x128xf32, #tpu.memory_space<vmem>>, vector<16x8xf32>
    %c336 = arith.constant 336 : index
    %c0_6 = arith.constant 0 : index
    %7 = vector.load %arg2[%c336, %c0_6] : memref<672x128xf32, #tpu.memory_space<vmem>>, vector<256x64xf32>
    %cst_7 = arith.constant dense<0.000000e+00> : vector<8x64xf32>
    %8 = tpu.matmul %5, %7, %cst_7 {dimension_numbers = #tpu.dot_dimension_numbers<[1], [0], [0], [1], [0, 0, 1, 1], [], []>} : vector<8x256xf32>, vector<256x64xf32>, vector<8x64xf32> -> vector<8x64xf32>
    %cst_8 = arith.constant dense<0.000000e+00> : vector<16x64xf32>
    %9 = tpu.matmul %6, %8, %cst_8 {dimension_numbers = #tpu.dot_dimension_numbers<[1], [0], [0], [1], [0, 0, 1, 1], [], []>} : vector<16x8xf32>, vector<8x64xf32>, vector<16x64xf32> -> vector<16x64xf32>
    %cst_9 = arith.constant 0.000000e+00 : f32
    %10 = vector.broadcast %cst_9 : f32 to vector<16x64xf32>
    %11 = arith.maximumf %9, %10 : vector<16x64xf32>
    %c24 = arith.constant 24 : index
    %c0_10 = arith.constant 0 : index
    %12 = vector.load %arg2[%c24, %c0_10] : memref<672x128xf32, #tpu.memory_space<vmem>>, vector<32x16xf32>
    %c592 = arith.constant 592 : index
    %c0_11 = arith.constant 0 : index
    %13 = vector.load %arg2[%c592, %c0_11] : memref<672x128xf32, #tpu.memory_space<vmem>>, vector<64x16xf32>
    %cst_12 = arith.constant dense<0.000000e+00> : vector<16x16xf32>
    %14 = tpu.matmul %11, %13, %cst_12 {dimension_numbers = #tpu.dot_dimension_numbers<[1], [0], [0], [1], [0, 0, 1, 1], [], []>} : vector<16x64xf32>, vector<64x16xf32>, vector<16x16xf32> -> vector<16x16xf32>
    %cst_13 = arith.constant dense<0.000000e+00> : vector<32x16xf32>
    %15 = tpu.matmul %12, %14, %cst_13 {dimension_numbers = #tpu.dot_dimension_numbers<[1], [0], [0], [1], [0, 0, 1, 1], [], []>} : vector<32x16xf32>, vector<16x16xf32>, vector<32x16xf32> -> vector<32x16xf32>
    %cst_14 = arith.constant 0.000000e+00 : f32
    %16 = vector.broadcast %cst_14 : f32 to vector<32x16xf32>
    %17 = arith.maximumf %15, %16 : vector<32x16xf32>
    %c56 = arith.constant 56 : index
    %c0_15 = arith.constant 0 : index
    %18 = vector.load %arg2[%c56, %c0_15] : memref<672x128xf32, #tpu.memory_space<vmem>>, vector<32x32xf32>
    %c656 = arith.constant 656 : index
    %c0_16 = arith.constant 0 : index
    %19 = vector.load %arg2[%c656, %c0_16] : memref<672x128xf32, #tpu.memory_space<vmem>>, vector<16x4xf32>
    %cst_17 = arith.constant dense<0.000000e+00> : vector<32x4xf32>
    %20 = tpu.matmul %17, %19, %cst_17 {dimension_numbers = #tpu.dot_dimension_numbers<[1], [0], [0], [1], [0, 0, 1, 1], [], []>} : vector<32x16xf32>, vector<16x4xf32>, vector<32x4xf32> -> vector<32x4xf32>
    %cst_18 = arith.constant dense<0.000000e+00> : vector<32x4xf32>
    %21 = tpu.matmul %18, %20, %cst_18 {dimension_numbers = #tpu.dot_dimension_numbers<[1], [0], [0], [1], [0, 0, 1, 1], [], []>} : vector<32x32xf32>, vector<32x4xf32>, vector<32x4xf32> -> vector<32x4xf32>
    %cst_19 = arith.constant 0.000000e+00 : f32
    %22 = vector.broadcast %cst_19 : f32 to vector<32x4xf32>
    %23 = arith.maximumf %21, %22 : vector<32x4xf32>
    %cst_20 = arith.constant dense<0.000000e+00> : vector<32xf32>
    %24 = vector.multi_reduction <add>, %23, %cst_20 [1] : vector<32x4xf32> to vector<32xf32>
    %25 = vector.shape_cast %24 : vector<32xf32> to vector<32x1xf32>
    %cst_21 = arith.constant 4.000000e+00 : f32
    %26 = vector.broadcast %cst_21 : f32 to vector<32x1xf32>
    %27 = arith.divf %25, %26 : vector<32x1xf32>
    %c88 = arith.constant 88 : index
    %c0_22 = arith.constant 0 : index
    %28 = vector.load %arg2[%c88, %c0_22] : memref<672x128xf32, #tpu.memory_space<vmem>>, vector<32x8xf32>
    %cst_23 = arith.constant dense<0.000000e+00> : vector<32x256xf32>
    %29 = tpu.matmul %28, %5, %cst_23 {dimension_numbers = #tpu.dot_dimension_numbers<[1], [0], [0], [1], [0, 0, 1, 1], [], []>} : vector<32x8xf32>, vector<8x256xf32>, vector<32x256xf32> -> vector<32x256xf32>
    %c120 = arith.constant 120 : index
    %c0_24 = arith.constant 0 : index
    %30 = vector.load %arg2[%c120, %c0_24] : memref<672x128xf32, #tpu.memory_space<vmem>>, vector<32x16xf32>
    %cst_25 = arith.constant dense<0.000000e+00> : vector<32x64xf32>
    %31 = tpu.matmul %30, %11, %cst_25 {dimension_numbers = #tpu.dot_dimension_numbers<[1], [0], [0], [1], [0, 0, 1, 1], [], []>} : vector<32x16xf32>, vector<16x64xf32>, vector<32x64xf32> -> vector<32x64xf32>
    %c152 = arith.constant 152 : index
    %c0_26 = arith.constant 0 : index
    %32 = vector.load %arg2[%c152, %c0_26] : memref<672x128xf32, #tpu.memory_space<vmem>>, vector<1x32xf32>
    %cst_27 = arith.constant dense<0.000000e+00> : vector<1x256xf32>
    %33 = tpu.matmul %32, %29, %cst_27 {dimension_numbers = #tpu.dot_dimension_numbers<[1], [0], [0], [1], [0, 0, 1, 1], [], []>} : vector<1x32xf32>, vector<32x256xf32>, vector<1x256xf32> -> vector<1x256xf32>
    %cst_28 = arith.constant dense<0xFF800000> : vector<1xf32>
    %34 = vector.multi_reduction <maximumf>, %33, %cst_28 [1] : vector<1x256xf32> to vector<1xf32>
    %35 = vector.shape_cast %34 : vector<1xf32> to vector<1x1xf32>
    %36 = vector.broadcast %35 : vector<1x1xf32> to vector<1x256xf32>
    %37 = arith.subf %33, %36 : vector<1x256xf32>
    %38 = math.exp %37 : vector<1x256xf32>
    %cst_29 = arith.constant dense<0.000000e+00> : vector<1xf32>
    %39 = vector.multi_reduction <add>, %38, %cst_29 [1] : vector<1x256xf32> to vector<1xf32>
    %40 = vector.shape_cast %39 : vector<1xf32> to vector<1x1xf32>
    %41 = vector.broadcast %40 : vector<1x1xf32> to vector<1x256xf32>
    %42 = arith.divf %38, %41 : vector<1x256xf32>
    %cst_30 = arith.constant dense<0.000000e+00> : vector<1x32xf32>
    %43 = tpu.matmul %42, %29, %cst_30 {dimension_numbers = #tpu.dot_dimension_numbers<[1], [1], [0], [0], [0, 0, 1, 0], [], []>} : vector<1x256xf32>, vector<32x256xf32>, vector<1x32xf32> -> vector<1x32xf32>
    %cst_31 = arith.constant dense<0.000000e+00> : vector<1x1xf32>
    %44 = tpu.matmul %32, %27, %cst_31 {dimension_numbers = #tpu.dot_dimension_numbers<[1], [0], [0], [1], [0, 0, 1, 1], [], []>} : vector<1x32xf32>, vector<32x1xf32>, vector<1x1xf32> -> vector<1x1xf32>
    %45 = vector.broadcast %44 : vector<1x1xf32> to vector<1x256xf32>
    %46 = arith.addf %33, %45 : vector<1x256xf32>
    %c153 = arith.constant 153 : index
    %c0_32 = arith.constant 0 : index
    %47 = vector.load %arg2[%c153, %c0_32] : memref<672x128xf32, #tpu.memory_space<vmem>>, vector<1x32xf32>
    %cst_33 = arith.constant dense<0.000000e+00> : vector<1x64xf32>
    %48 = tpu.matmul %47, %31, %cst_33 {dimension_numbers = #tpu.dot_dimension_numbers<[1], [0], [0], [1], [0, 0, 1, 1], [], []>} : vector<1x32xf32>, vector<32x64xf32>, vector<1x64xf32> -> vector<1x64xf32>
    %cst_34 = arith.constant dense<0xFF800000> : vector<1xf32>
    %49 = vector.multi_reduction <maximumf>, %48, %cst_34 [1] : vector<1x64xf32> to vector<1xf32>
    %50 = vector.shape_cast %49 : vector<1xf32> to vector<1x1xf32>
    %51 = vector.broadcast %50 : vector<1x1xf32> to vector<1x64xf32>
    %52 = arith.subf %48, %51 : vector<1x64xf32>
    %53 = math.exp %52 : vector<1x64xf32>
    %cst_35 = arith.constant dense<0.000000e+00> : vector<1xf32>
    %54 = vector.multi_reduction <add>, %53, %cst_35 [1] : vector<1x64xf32> to vector<1xf32>
    %55 = vector.shape_cast %54 : vector<1xf32> to vector<1x1xf32>
    %56 = vector.broadcast %55 : vector<1x1xf32> to vector<1x64xf32>
    %57 = arith.divf %53, %56 : vector<1x64xf32>
    %cst_36 = arith.constant dense<0.000000e+00> : vector<1x32xf32>
    %58 = tpu.matmul %57, %31, %cst_36 {dimension_numbers = #tpu.dot_dimension_numbers<[1], [1], [0], [0], [0, 0, 1, 0], [], []>} : vector<1x64xf32>, vector<32x64xf32>, vector<1x32xf32> -> vector<1x32xf32>
    %cst_37 = arith.constant dense<0.000000e+00> : vector<1x1xf32>
    %59 = tpu.matmul %47, %27, %cst_37 {dimension_numbers = #tpu.dot_dimension_numbers<[1], [0], [0], [1], [0, 0, 1, 1], [], []>} : vector<1x32xf32>, vector<32x1xf32>, vector<1x1xf32> -> vector<1x1xf32>
    %60 = vector.broadcast %59 : vector<1x1xf32> to vector<1x64xf32>
    %61 = arith.addf %48, %60 : vector<1x64xf32>
    %c154 = arith.constant 154 : index
    %c0_38 = arith.constant 0 : index
    %62 = vector.load %arg2[%c154, %c0_38] : memref<672x128xf32, #tpu.memory_space<vmem>>, vector<1x32xf32>
    %cst_39 = arith.constant dense<0.000000e+00> : vector<1x16xf32>
    %63 = tpu.matmul %62, %17, %cst_39 {dimension_numbers = #tpu.dot_dimension_numbers<[1], [0], [0], [1], [0, 0, 1, 1], [], []>} : vector<1x32xf32>, vector<32x16xf32>, vector<1x16xf32> -> vector<1x16xf32>
    %cst_40 = arith.constant dense<0xFF800000> : vector<1xf32>
    %64 = vector.multi_reduction <maximumf>, %63, %cst_40 [1] : vector<1x16xf32> to vector<1xf32>
    %65 = vector.shape_cast %64 : vector<1xf32> to vector<1x1xf32>
    %66 = vector.broadcast %65 : vector<1x1xf32> to vector<1x16xf32>
    %67 = arith.subf %63, %66 : vector<1x16xf32>
    %68 = math.exp %67 : vector<1x16xf32>
    %cst_41 = arith.constant dense<0.000000e+00> : vector<1xf32>
    %69 = vector.multi_reduction <add>, %68, %cst_41 [1] : vector<1x16xf32> to vector<1xf32>
    %70 = vector.shape_cast %69 : vector<1xf32> to vector<1x1xf32>
    %71 = vector.broadcast %70 : vector<1x1xf32> to vector<1x16xf32>
    %72 = arith.divf %68, %71 : vector<1x16xf32>
    %cst_42 = arith.constant dense<0.000000e+00> : vector<1x32xf32>
    %73 = tpu.matmul %72, %17, %cst_42 {dimension_numbers = #tpu.dot_dimension_numbers<[1], [1], [0], [0], [0, 0, 1, 0], [], []>} : vector<1x16xf32>, vector<32x16xf32>, vector<1x32xf32> -> vector<1x32xf32>
    %cst_43 = arith.constant dense<0.000000e+00> : vector<1x1xf32>
    %74 = tpu.matmul %62, %27, %cst_43 {dimension_numbers = #tpu.dot_dimension_numbers<[1], [0], [0], [1], [0, 0, 1, 1], [], []>} : vector<1x32xf32>, vector<32x1xf32>, vector<1x1xf32> -> vector<1x1xf32>
    %75 = vector.broadcast %74 : vector<1x1xf32> to vector<1x16xf32>
    %76 = arith.addf %63, %75 : vector<1x16xf32>
    %c155 = arith.constant 155 : index
    %c0_44 = arith.constant 0 : index
    %77 = vector.load %arg2[%c155, %c0_44] : memref<672x128xf32, #tpu.memory_space<vmem>>, vector<1x32xf32>
    %cst_45 = arith.constant dense<0.000000e+00> : vector<1x4xf32>
    %78 = tpu.matmul %77, %23, %cst_45 {dimension_numbers = #tpu.dot_dimension_numbers<[1], [0], [0], [1], [0, 0, 1, 1], [], []>} : vector<1x32xf32>, vector<32x4xf32>, vector<1x4xf32> -> vector<1x4xf32>
    %cst_46 = arith.constant dense<0xFF800000> : vector<1xf32>
    %79 = vector.multi_reduction <maximumf>, %78, %cst_46 [1] : vector<1x4xf32> to vector<1xf32>
    %80 = vector.shape_cast %79 : vector<1xf32> to vector<1x1xf32>
    %81 = vector.broadcast %80 : vector<1x1xf32> to vector<1x4xf32>
    %82 = arith.subf %78, %81 : vector<1x4xf32>
    %83 = math.exp %82 : vector<1x4xf32>
    %cst_47 = arith.constant dense<0.000000e+00> : vector<1xf32>
    %84 = vector.multi_reduction <add>, %83, %cst_47 [1] : vector<1x4xf32> to vector<1xf32>
    %85 = vector.shape_cast %84 : vector<1xf32> to vector<1x1xf32>
    %86 = vector.broadcast %85 : vector<1x1xf32> to vector<1x4xf32>
    %87 = arith.divf %83, %86 : vector<1x4xf32>
    %cst_48 = arith.constant dense<0.000000e+00> : vector<1x32xf32>
    %88 = tpu.matmul %87, %23, %cst_48 {dimension_numbers = #tpu.dot_dimension_numbers<[1], [1], [0], [0], [0, 0, 1, 0], [], []>} : vector<1x4xf32>, vector<32x4xf32>, vector<1x32xf32> -> vector<1x32xf32>
    %cst_49 = arith.constant dense<0.000000e+00> : vector<1x1xf32>
    %89 = tpu.matmul %77, %27, %cst_49 {dimension_numbers = #tpu.dot_dimension_numbers<[1], [0], [0], [1], [0, 0, 1, 1], [], []>} : vector<1x32xf32>, vector<32x1xf32>, vector<1x1xf32> -> vector<1x1xf32>
    %90 = vector.broadcast %89 : vector<1x1xf32> to vector<1x4xf32>
    %91 = arith.addf %78, %90 : vector<1x4xf32>
    %92 = tpu.concatenate %43, %58, %73, %88 in 1 : vector<1x32xf32>, vector<1x32xf32>, vector<1x32xf32>, vector<1x32xf32> -> vector<1x128xf32>
    %c160 = arith.constant 160 : index
    %c0_50 = arith.constant 0 : index
    %93 = vector.load %arg2[%c160, %c0_50] : memref<672x128xf32, #tpu.memory_space<vmem>>, vector<128x32xf32>
    %cst_51 = arith.constant dense<0.000000e+00> : vector<1x32xf32>
    %94 = tpu.matmul %92, %93, %cst_51 {dimension_numbers = #tpu.dot_dimension_numbers<[1], [0], [0], [1], [0, 0, 1, 1], [], []>} : vector<1x128xf32>, vector<128x32xf32>, vector<1x32xf32> -> vector<1x32xf32>
    %c288 = arith.constant 288 : index
    %c0_52 = arith.constant 0 : index
    %95 = vector.load %arg2[%c288, %c0_52] : memref<672x128xf32, #tpu.memory_space<vmem>>, vector<1x32xf32>
    %96 = arith.addf %94, %95 : vector<1x32xf32>
    %cst_53 = arith.constant 0.000000e+00 : f32
    %97 = vector.broadcast %cst_53 : f32 to vector<1x32xf32>
    %98 = arith.maximumf %96, %97 : vector<1x32xf32>
    %c296 = arith.constant 296 : index
    %c0_54 = arith.constant 0 : index
    %99 = vector.load %arg2[%c296, %c0_54] : memref<672x128xf32, #tpu.memory_space<vmem>>, vector<32x128xf32>
    %cst_55 = arith.constant dense<0.000000e+00> : vector<1x128xf32>
    %100 = tpu.matmul %98, %99, %cst_55 {dimension_numbers = #tpu.dot_dimension_numbers<[1], [0], [0], [1], [0, 0, 1, 1], [], []>} : vector<1x32xf32>, vector<32x128xf32>, vector<1x128xf32> -> vector<1x128xf32>
    %c328 = arith.constant 328 : index
    %c0_56 = arith.constant 0 : index
    %101 = vector.load %arg2[%c328, %c0_56] : memref<672x128xf32, #tpu.memory_space<vmem>>, vector<1x128xf32>
    %102 = arith.addf %100, %101 : vector<1x128xf32>
    %cst_57 = arith.constant 0.000000e+00 : f32
    %103 = vector.broadcast %cst_57 : f32 to vector<1x128xf32>
    %104 = tpu.concatenate %102, %103 in 1 : vector<1x128xf32>, vector<1x128xf32> -> vector<1x256xf32>
    %cst_58 = arith.constant 0.000000e+00 : f32
    %105 = vector.broadcast %cst_58 : f32 to vector<1x192xf32>
    %106 = tpu.concatenate %61, %105 in 1 : vector<1x64xf32>, vector<1x192xf32> -> vector<1x256xf32>
    %cst_59 = arith.constant 0.000000e+00 : f32
    %107 = vector.broadcast %cst_59 : f32 to vector<1x240xf32>
    %108 = tpu.concatenate %76, %107 in 1 : vector<1x16xf32>, vector<1x240xf32> -> vector<1x256xf32>
    %cst_60 = arith.constant 0.000000e+00 : f32
    %109 = vector.broadcast %cst_60 : f32 to vector<1x252xf32>
    %110 = tpu.concatenate %91, %109 in 1 : vector<1x4xf32>, vector<1x252xf32> -> vector<1x256xf32>
    %cst_61 = arith.constant 0.000000e+00 : f32
    %111 = vector.broadcast %cst_61 : f32 to vector<3x256xf32>
    %112 = tpu.concatenate %104, %46, %106, %108, %110, %111 in 0 : vector<1x256xf32>, vector<1x256xf32>, vector<1x256xf32>, vector<1x256xf32>, vector<1x256xf32>, vector<3x256xf32> -> vector<8x256xf32>
    %c0_62 = arith.constant 0 : index
    %c0_63 = arith.constant 0 : index
    %c0_64 = arith.constant 0 : index
    %113 = vector.load %arg3[%c0_62, %c0_63, %c0_64] : memref<1x8x256xf32, #tpu.memory_space<vmem>>, vector<1x8x256xf32>
    %114 = vector.shape_cast %113 : vector<1x8x256xf32> to vector<8x256xf32>
    %115 = vector.shape_cast %112 : vector<8x256xf32> to vector<1x8x256xf32>
    tpu.vector_store %arg3[%c0_62, %c0_63, %c0_64], %115 {strides = array<i32>} : memref<1x8x256xf32, #tpu.memory_space<vmem>>, vector<1x8x256xf32>,
    return
  }
  func.func @transform_0(%arg0: i32) -> (i32, i32, i32) {
    %c0_i32 = arith.constant 0 : i32
    %c0_i32_0 = arith.constant 0 : i32
    %c0_i32_1 = arith.constant 0 : i32
    return %arg0, %c0_i32, %c0_i32_0 : i32, i32, i32
  }
  func.func @transform_1(%arg0: i32) -> (i32, i32) {
    %c0_i32 = arith.constant 0 : i32
    %c0_i32_0 = arith.constant 0 : i32
    %c0_i32_1 = arith.constant 0 : i32
    return %c0_i32, %c0_i32_0 : i32, i32
  }
  func.func @transform_2(%arg0: i32) -> (i32, i32, i32) {
    %c0_i32 = arith.constant 0 : i32
    %c0_i32_0 = arith.constant 0 : i32
    %c0_i32_1 = arith.constant 0 : i32
    return %arg0, %c0_i32, %c0_i32_0 : i32, i32, i32
  }
}

</mosaic_0001>

<llo_original>
// kernel: squeeze.6
$region0: #{squeeze.6}
  %s0 = inlined_call_operand.vmem [shape: f32[2,256], index: 0, kind: input, shape index: {}]
  %s1 = inlined_call_operand.hbm [shape: f32[2,1,16,16], index: 1, kind: output, shape index: {}]
  $region1: #{squeeze.6} parent=0
    #allocation0 [shape = 'u8[16384]{0}', space=vmem, size = 0x4000, scoped, tag = 'operand span for operand 1']
    #allocation1 [shape = 's32[1]{0}', space=sflag, size = 0x4, scoped, tag = 'scoped memory for squeeze.6']
    #allocation2 [shape = 'u8[8192]{0}', space=vmem, size = 0x2000, scoped, tag = 'scoped mem for input reshape']
    %2 = vsyncpa [#allocation1], 0
    %s4 = sshllo.u32 0, 2
    %s5 = scalar_lea.vmem %s0, 2
    %v6 = vld [vmem:[%s5] sm:%s4]
    %s7 = scalar_lea.vmem [#allocation2], 8
    %8 = vst [vmem:[%s7] sm:%s4] %v6
    %v9 = vld [vmem:[%s0] sm:%s4]
    %10 = vst [vmem:[#allocation2] sm:%s4] %v9
    %v11 = vld [vmem:[#allocation2] sm:$0x3]
    %vm12 = vcmask 130048
    %13 = vst.msk [vmem:[#allocation0] ss:$16 sm:$0x3] %vm12, %v11
    %s14 = scalar_lea.vmem [#allocation2], 8
    %v15 = vld [vmem:[%s14] sm:$0x3]
    %vm16 = vcmask 130048
    %s17 = scalar_lea.vmem [#allocation0], 8
    %18 = vst.msk [vmem:[%s17] ss:$16 sm:$0x3] %vm16, %v15
    %v19 = vld.sshfl [vmem:[#allocation2] sm:$0xff pattern:$0x99999180]
    %20 = vrot.lane.b32.xlu0 %v19, 112
    %v21 = vpop.permute.xlu0 %20
    %vm22 = vcmask 130048
    %s23 = scalar_lea.vmem [#allocation0], 1
    %24 = vst.msk [vmem:[%s23] ss:$8 sm:$0xf] %vm22, %v21
    %v25 = vld.sshfl [vmem:[#allocation2] sm:$0xff pattern:$0x99999180]
    %26 = vrot.lane.b32.xlu0 %v25, 96
    %v27 = vpop.permute.xlu0 %26
    %vm28 = vcmask 130048
    %s29 = scalar_lea.vmem [#allocation0], 2
    %30 = vst.msk [vmem:[%s29] ss:$8 sm:$0xf] %vm28, %v27
    %v31 = vld.sshfl [vmem:[#allocation2] sm:$0xff pattern:$0x99999180]
    %32 = vrot.lane.b32.xlu0 %v31, 80
    %v33 = vpop.permute.xlu0 %32
    %vm34 = vcmask 130048
    %s35 = scalar_lea.vmem [#allocation0], 3
    %36 = vst.msk [vmem:[%s35] ss:$8 sm:$0xf] %vm34, %v33
    %v37 = vld.sshfl [vmem:[#allocation2] sm:$0xff pattern:$0x99999180]
    %38 = vrot.lane.b32.xlu0 %v37, 64
    %v39 = vpop.permute.xlu0 %38
    %vm40 = vcmask 130048
    %s41 = scalar_lea.vmem [#allocation0], 4
    %42 = vst.msk [vmem:[%s41] ss:$8 sm:$0xf] %vm40, %v39
    %v43 = vld.sshfl [vmem:[#allocation2] sm:$0xff pattern:$0x99999180]
    %44 = vrot.lane.b32.xlu0 %v43, 48
    %v45 = vpop.permute.xlu0 %44
    %vm46 = vcmask 130048
    %s47 = scalar_lea.vmem [#allocation0], 5
    %48 = vst.msk [vmem:[%s47] ss:$8 sm:$0xf] %vm46, %v45
    %v49 = vld.sshfl [vmem:[#allocation2] sm:$0xff pattern:$0x99999180]
    %50 = vrot.lane.b32.xlu0 %v49, 32
    %v51 = vpop.permute.xlu0 %50
    %vm52 = vcmask 130048
    %s53 = scalar_lea.vmem [#allocation0], 6
    %54 = vst.msk [vmem:[%s53] ss:$8 sm:$0xf] %vm52, %v51
    %v55 = vld.sshfl [vmem:[#allocation2] sm:$0xff pattern:$0x99999180]
    %56 = vrot.lane.b32.xlu0 %v55, 16
    %v57 = vpop.permute.xlu0 %56
    %vm58 = vcmask 130048
    %s59 = scalar_lea.vmem [#allocation0], 7
    %60 = vst.msk [vmem:[%s59] ss:$8 sm:$0xf] %vm58, %v57
    %s62 = ssub.s32 512, 512
    %63 = vsyncadd [#allocation1], %s62
    %s65 = sshll.u32 [#allocation0], 4
    %s66 = int_to_ptr.vmem [resolvable:$true] %s65
    %68 = dma.vmem_to_hbm [thread:$0]  %s66, 512, %s1, [#allocation1]
    %69 = dma.done [#allocation1], 512
    %70 = vsyncpa [#allocation1], 1

// kernel: squeeze.7
$region0: #{squeeze.7}
  %s0 = inlined_call_operand.vmem [shape: f32[2,64], index: 0, kind: input, shape index: {}]
  %s1 = inlined_call_operand.hbm [shape: f32[2,1,8,8], index: 1, kind: output, shape index: {}]
  $region1: #{squeeze.7} parent=0
    #allocation0 [shape = 'u8[8192]{0}', space=vmem, size = 0x2000, scoped, tag = 'operand span for operand 1']
    #allocation1 [shape = 's32[1]{0}', space=sflag, size = 0x4, scoped, tag = 'scoped memory for squeeze.7']
    #allocation2 [shape = 'u8[4096]{0}', space=vmem, size = 0x1000, scoped, tag = 'scoped mem for input reshape']
    %2 = vsyncpa [#allocation1], 0
    %s4 = sshllo.u32 0, 2
    %v5 = vld [vmem:[%s0] sm:%s4]
    %6 = vst [vmem:[#allocation2] sm:%s4] %v5
    %v7 = vld [vmem:[#allocation2] sm:$0x3]
    %vm8 = vcmask 64512
    %9 = vst.msk [vmem:[#allocation0] ss:$8 sm:$0x3] %vm8, %v7
    %v10 = vld [vmem:[#allocation2] sm:$0x3]
    %11 = vrot.lane.b32.xlu0 %v10, 120
    %v12 = vpop.permute.xlu0 %11
    %vm13 = vcmask 64512
    %s14 = scalar_lea.vmem [#allocation0], 1
    %15 = vst.msk [vmem:[%s14] ss:$8 sm:$0x3] %vm13, %v12
    %v16 = vld [vmem:[#allocation2] sm:$0x3]
    %17 = vrot.lane.b32.xlu0 %v16, 112
    %v18 = vpop.permute.xlu0 %17
    %vm19 = vcmask 64512
    %s20 = scalar_lea.vmem [#allocation0], 2
    %21 = vst.msk [vmem:[%s20] ss:$8 sm:$0x3] %vm19, %v18
    %v22 = vld [vmem:[#allocation2] sm:$0x3]
    %23 = vrot.lane.b32.xlu0 %v22, 104
    %v24 = vpop.permute.xlu0 %23
    %vm25 = vcmask 64512
    %s26 = scalar_lea.vmem [#allocation0], 3
    %27 = vst.msk [vmem:[%s26] ss:$8 sm:$0x3] %vm25, %v24
    %v28 = vld [vmem:[#allocation2] sm:$0x3]
    %29 = vrot.lane.b32.xlu0 %v28, 96
    %v30 = vpop.permute.xlu0 %29
    %vm31 = vcmask 64512
    %s32 = scalar_lea.vmem [#allocation0], 4
    %33 = vst.msk [vmem:[%s32] ss:$8 sm:$0x3] %vm31, %v30
    %v34 = vld [vmem:[#allocation2] sm:$0x3]
    %35 = vrot.lane.b32.xlu0 %v34, 88
    %v36 = vpop.permute.xlu0 %35
    %vm37 = vcmask 64512
    %s38 = scalar_lea.vmem [#allocation0], 5
    %39 = vst.msk [vmem:[%s38] ss:$8 sm:$0x3] %vm37, %v36
    %v40 = vld [vmem:[#allocation2] sm:$0x3]
    %41 = vrot.lane.b32.xlu0 %v40, 80
    %v42 = vpop.permute.xlu0 %41
    %vm43 = vcmask 64512
    %s44 = scalar_lea.vmem [#allocation0], 6
    %45 = vst.msk [vmem:[%s44] ss:$8 sm:$0x3] %vm43, %v42
    %v46 = vld [vmem:[#allocation2] sm:$0x3]
    %47 = vrot.lane.b32.xlu0 %v46, 72
    %v48 = vpop.permute.xlu0 %47
    %vm49 = vcmask 64512
    %s50 = scalar_lea.vmem [#allocation0], 7
    %51 = vst.msk [vmem:[%s50] ss:$8 sm:$0x3] %vm49, %v48
    %s53 = ssub.s32 256, 256
    %54 = vsyncadd [#allocation1], %s53
    %s56 = sshll.u32 [#allocation0], 4
    %s57 = int_to_ptr.vmem [resolvable:$true] %s56
    %59 = dma.vmem_to_hbm [thread:$0]  %s57, 256, %s1, [#allocation1]
    %60 = dma.done [#allocation1], 256
    %61 = vsyncpa [#allocation1], 1

// kernel: squeeze.8
$region0: #{squeeze.8}
  %s0 = inlined_call_operand.vmem [shape: f32[2,16], index: 0, kind: input, shape index: {}]
  %s1 = inlined_call_operand.hbm [shape: f32[2,1,4,4], index: 1, kind: output, shape index: {}]
  $region1: #{squeeze.8} parent=0
    #allocation0 [shape = 'u8[4096]{0}', space=vmem, size = 0x1000, scoped, tag = 'operand span for operand 1']
    #allocation1 [shape = 's32[1]{0}', space=sflag, size = 0x4, scoped, tag = 'scoped memory for squeeze.8']
    #allocation2 [shape = 'u8[8192]{0}', space=vmem, size = 0x2000, scoped, tag = 'scoped mem for output reshape']
    #allocation3 [shape = 'u8[4096]{0}', space=vmem, size = 0x1000, scoped, tag = 'scoped mem for input reshape']
    %2 = vsyncpa [#allocation1], 0
    %s4 = sshllo.u32 0, 2
    %v5 = vld [vmem:[%s0] sm:%s4]
    %6 = vst [vmem:[#allocation3] sm:%s4] %v5
    %v7 = vld [vmem:[#allocation3] sm:$0x3]
    %vm8 = vcmask 31744
    %9 = vst.msk [vmem:[#allocation2] ss:$8 sm:$0x3] %vm8, %v7
    %v10 = vld [vmem:[#allocation3] sm:$0x3]
    %11 = vrot.lane.b32.xlu0 %v10, 124
    %v12 = vpop.permute.xlu0 %11
    %vm13 = vcmask 31744
    %s14 = scalar_lea.vmem [#allocation2], 1
    %15 = vst.msk [vmem:[%s14] ss:$8 sm:$0x3] %vm13, %v12
    %v16 = vld [vmem:[#allocation3] sm:$0x3]
    %17 = vrot.lane.b32.xlu0 %v16, 120
    %v18 = vpop.permute.xlu0 %17
    %vm19 = vcmask 31744
    %s20 = scalar_lea.vmem [#allocation2], 2
    %21 = vst.msk [vmem:[%s20] ss:$8 sm:$0x3] %vm19, %v18
    %v22 = vld [vmem:[#allocation3] sm:$0x3]
    %23 = vrot.lane.b32.xlu0 %v22, 116
    %v24 = vpop.permute.xlu0 %23
    %vm25 = vcmask 31744
    %s26 = scalar_lea.vmem [#allocation2], 3
    %27 = vst.msk [vmem:[%s26] ss:$8 sm:$0x3] %vm25, %v24
    %s29 = sshllo.u32 0, 4
    %v31 = vld [vmem:[#allocation2] sm:%s29]
    %s32 = sshllo.u32 0, 4
    %33 = vst [vmem:[#allocation0] sm:%s32] %v31
    %s34 = scalar_lea.vmem [#allocation2], 8
    %v35 = vld [vmem:[%s34] sm:%s29]
    %s36 = sshllo.u32 0, 4
    %s37 = scalar_lea.vmem [#allocation0], 4
    %38 = vst [vmem:[%s37] sm:%s36] %v35
    %s40 = ssub.s32 128, 128
    %41 = vsyncadd [#allocation1], %s40
    %s43 = sshll.u32 [#allocation0], 4
    %s44 = int_to_ptr.vmem [resolvable:$true] %s43
    %46 = dma.vmem_to_hbm [thread:$0]  %s44, 128, %s1, [#allocation1]
    %47 = dma.done [#allocation1], 128
    %48 = vsyncpa [#allocation1], 1

// kernel: squeeze.9
$region0: #{squeeze.9}
  %s0 = inlined_call_operand.vmem [shape: f32[2,4], index: 0, kind: input, shape index: {}]
  %s1 = inlined_call_operand.hbm [shape: f32[2,1,2,2], index: 1, kind: output, shape index: {}]
  $region1: #{squeeze.9} parent=0
    #allocation0 [shape = 'u8[2048]{0}', space=vmem, size = 0x800, scoped, tag = 'operand span for operand 1']
    #allocation1 [shape = 's32[1]{0}', space=sflag, size = 0x4, scoped, tag = 'scoped memory for squeeze.9']
    #allocation2 [shape = 'u8[8192]{0}', space=vmem, size = 0x2000, scoped, tag = 'scoped mem for output reshape']
    #allocation3 [shape = 'u8[4096]{0}', space=vmem, size = 0x1000, scoped, tag = 'scoped mem for input reshape']
    %2 = vsyncpa [#allocation1], 0
    %s4 = sshllo.u32 0, 2
    %v5 = vld [vmem:[%s0] sm:%s4]
    %6 = vst [vmem:[#allocation3] sm:%s4] %v5
    %v7 = vld [vmem:[#allocation3] sm:$0x3]
    %vm8 = vcmask 15360
    %9 = vst.msk [vmem:[#allocation2] ss:$8 sm:$0x3] %vm8, %v7
    %v10 = vld [vmem:[#allocation3] sm:$0x3]
    %11 = vrot.lane.b32.xlu0 %v10, 126
    %v12 = vpop.permute.xlu0 %11
    %vm13 = vcmask 15360
    %s14 = scalar_lea.vmem [#allocation2], 1
    %15 = vst.msk [vmem:[%s14] ss:$8 sm:$0x3] %vm13, %v12
    %s17 = sshllo.u32 0, 2
    %v19 = vld [vmem:[#allocation2] sm:%s17]
    %s20 = sshllo.u32 0, 2
    %21 = vst [vmem:[#allocation0] sm:%s20] %v19
    %s22 = scalar_lea.vmem [#allocation2], 8
    %v23 = vld [vmem:[%s22] sm:%s17]
    %s24 = sshllo.u32 0, 2
    %s25 = scalar_lea.vmem [#allocation0], 2
    %26 = vst [vmem:[%s25] sm:%s24] %v23
    %s28 = ssub.s32 64, 64
    %29 = vsyncadd [#allocation1], %s28
    %s31 = sshll.u32 [#allocation0], 4
    %s32 = int_to_ptr.vmem [resolvable:$true] %s31
    %34 = dma.vmem_to_hbm [thread:$0]  %s32, 64, %s1, [#allocation1]
    %35 = dma.done [#allocation1], 64
    %36 = vsyncpa [#allocation1], 1

// kernel: attn_resnet_forward.1
$region0: #{attn_resnet_forward.1}
  #allocation0 [shape = 'u32[]', space=smem, size = 0x4, offset = 0x4, fixed_abs, tag = 'smem constant byte address 0x4 - core index']
  #allocation1 [shape = 'u32[144,128]{1,0:T(1,128)}', space=vmem, size = 0x12000, scoped, tag = 'internal scratch']
  %s0 = inlined_call_operand.vmem [shape: f32[2,3,256], index: 0, kind: input, shape index: {}]
  %s1 = inlined_call_operand.vmem [shape: f32[672,128], index: 1, kind: input, shape index: {}]
  %s2 = inlined_call_operand.vmem [shape: f32[2,8,256], index: 2, kind: output, shape index: {}]
  %s3 = sld [smem:[#allocation0]]
  $region41: #{attn_resnet_forward.1} parent=0
    _
  %s5 = ssub.s32 1, %s3
  %s6 = scalar_select 0, %s5, %s3
  loop: start=0, step=1, limit=4
  $region2: #{attn_resnet_forward.1} parent=0 // loop_pre_header
    _
  $region3: #{attn_resnet_forward.1} parent=0 // loop_header
    %s8 = sphi 0, %s12
    %p9 = scmp.ge.s32.totalorder %s8, 4
    %s18 = sphi 0, %s20
    %s21 = sphi 0, %s18
    %s22 = sphi 0, %s21
    %s38 = sphi 0, %s22
    %s42 = sphi 0, %s42
    %s44 = sphi 0, %s42
    %s45 = sphi 0, %s44
    %s59 = sphi 0, %s45
    %s65 = sphi 0, %s67
    %s68 = sphi 0, %s65
    %s69 = sphi 0, %s68
    %s85 = sphi 0, %s69
  $region4: #{attn_resnet_forward.1} parent=0 // loop_header_branch
    %11 = sbr.rel (%p9) target = $region8
  $region5: #{attn_resnet_forward.1} parent=0 // loop_body
    %s13 = ssub.s32 %s8, 1
    %s14 = ssub.s32 %s8, 2
    %s15 = sadd.s32 %s8, 1
    %s16 = ssub.s32 %s8, %s15
    %p17 = scmp.eq.s32.totalorder %s16, 0
    %s19 = sadd.s32 %s18, 1
    %s20 = scalar_select %p17, %s18, %s19
    %p23 = pneg %p17
    %p24 = scmp.eq.s32.totalorder %s8, 1
    %p25 = por %p23, %p24
    %p26 = scmp.ne.s32.totalorder %s18, %s21
    %p27 = scmp.eq.s32.totalorder %s8, 0
    %p28 = por %p26, %p27
    %p29 = scmp.ne.s32.totalorder %s18, %s21
    %p30 = scmp.eq.s32.totalorder %s13, 1
    %p31 = por %p29, %p30
    %p32 = scmp.ne.s32.totalorder %s21, %s22
    %p33 = scmp.eq.s32.totalorder %s13, 0
    %p34 = por %p32, %p33
    %p35 = scmp.ne.s32.totalorder %s21, %s22
    %p36 = scmp.eq.s32.totalorder %s14, 1
    %p37 = por %p35, %p36
    %p39 = scmp.ne.s32.totalorder %s22, %s38
    %p40 = scmp.eq.s32.totalorder %s14, 0
    %p41 = por %p39, %p40
    %s43 = sadd.s32 %s42, 1
    %p46 = scmp.eq.s32.totalorder %s8, 1
    %p47 = scmp.ne.s32.totalorder %s42, %s44
    %p48 = scmp.eq.s32.totalorder %s8, 0
    %p49 = por %p47, %p48
    %p50 = scmp.ne.s32.totalorder %s42, %s44
    %p51 = scmp.eq.s32.totalorder %s13, 1
    %p52 = por %p50, %p51
    %p53 = scmp.ne.s32.totalorder %s44, %s45
    %p54 = scmp.eq.s32.totalorder %s13, 0
    %p55 = por %p53, %p54
    %p56 = scmp.ne.s32.totalorder %s44, %s45
    %p57 = scmp.eq.s32.totalorder %s14, 1
    %p58 = por %p56, %p57
    %p60 = scmp.ne.s32.totalorder %s45, %s59
    %p61 = scmp.eq.s32.totalorder %s14, 0
    %p62 = por %p60, %p61
    %s63 = ssub.s32 %s8, %s15
    %p64 = scmp.eq.s32.totalorder %s63, 0
    %s66 = sadd.s32 %s65, 1
    %s67 = scalar_select %p64, %s65, %s66
    %p70 = pneg %p64
    %p71 = scmp.eq.s32.totalorder %s8, 1
    %p72 = por %p70, %p71
    %p73 = scmp.ne.s32.totalorder %s65, %s68
    %p74 = scmp.eq.s32.totalorder %s8, 0
    %p75 = por %p73, %p74
    %p76 = scmp.ne.s32.totalorder %s65, %s68
    %p77 = scmp.eq.s32.totalorder %s13, 1
    %p78 = por %p76, %p77
    %p79 = scmp.ne.s32.totalorder %s68, %s69
    %p80 = scmp.eq.s32.totalorder %s13, 0
    %p81 = por %p79, %p80
    %p82 = scmp.ne.s32.totalorder %s68, %s69
    %p83 = scmp.eq.s32.totalorder %s14, 1
    %p84 = por %p82, %p83
    %p86 = scmp.ne.s32.totalorder %s69, %s85
    %p87 = scmp.eq.s32.totalorder %s14, 0
    %p88 = por %p86, %p87
    %p89 = scmp.le.s32.totalorder 1, %s8
    %p90 = scmp.lt.s32.totalorder %s8, 3
    %p91 = pnand %p89, %p90
    %p92 = pneg %p91
    // Predicated region
    $region9: #{attn_resnet_forward.1} parent=5 // pred_check
      _
    $region10: #{attn_resnet_forward.1} parent=5 // pred_check_branch
      %94 = sbr.rel (%p91) target = $region12
    $region11: #{attn_resnet_forward.1} parent=5 // pred_region
      %s95 = ssub.s32 %s8, 1
      // Predicated region
      $region13: #{attn_resnet_forward.1} parent=11 // pred_check
        %p96 = pneg %p55
      $region14: #{attn_resnet_forward.1} parent=11 // pred_check_branch
        %98 = sbr.rel (%p96) target = $region16
      $region15: #{attn_resnet_forward.1} parent=11 // pred_region
        _
      $region16: #{attn_resnet_forward.1} parent=11 // pred_fallthru
        _
    $region12: #{attn_resnet_forward.1} parent=5 // pred_fallthru
      _
    %p99 = scmp.lt.s32.totalorder %s8, 2
    // Predicated region
    $region17: #{attn_resnet_forward.1} parent=5 // pred_check
      %p100 = pneg %p99
    $region18: #{attn_resnet_forward.1} parent=5 // pred_check_branch
      %102 = sbr.rel (%p100) target = $region20
    $region19: #{attn_resnet_forward.1} parent=5 // pred_region
      // Predicated region
      $region21: #{attn_resnet_forward.1} parent=19 // pred_check
        %p103 = pneg %p28
      $region22: #{attn_resnet_forward.1} parent=19 // pred_check_branch
        %105 = sbr.rel (%p103) target = $region24
      $region23: #{attn_resnet_forward.1} parent=19 // pred_region
        %p106 = scmp.lt.s32.totalorder %s8, 1
        %s107 = scalar_select %p106, %s8, 1
        %s108 = smul.addr %s107, 2
        %s109 = smul.addr %s108, 4
        %s110 = scalar_lea.vmem %s0, %s109
      $region24: #{attn_resnet_forward.1} parent=19 // pred_fallthru
        _
    $region20: #{attn_resnet_forward.1} parent=5 // pred_fallthru
      _
    %p111 = scmp.le.s32.totalorder 1, %s8
    %p112 = scmp.lt.s32.totalorder %s8, 3
    %p113 = pnand %p111, %p112
    %p114 = pneg %p113
    // Predicated region
    $region25: #{attn_resnet_forward.1} parent=5 // pred_check
      _
    $region26: #{attn_resnet_forward.1} parent=5 // pred_check_branch
      %116 = sbr.rel (%p113) target = $region28
    $region27: #{attn_resnet_forward.1} parent=5 // pred_region
      %s117 = ssub.s32 %s8, 1
      %p118 = scmp.lt.s32.totalorder %s13, 1
      %s119 = scalar_select %p118, %s13, 1
      %s120 = smul.addr %s119, 2
      %s121 = smul.addr %s120, 4
      %s122 = scalar_lea.vmem %s0, %s121
      %p123 = pneg %p34
      %p124 = pneg %p31
      %p125 = pneg %p55
      %p126 = pneg %p52
      %p127 = pneg %p81
      %p128 = pneg %p78
      %p129 = scmp.lt.s32.totalorder %s13, 1
      %s130 = scalar_select %p129, %s13, 1
      %s131 = smul.addr %s130, 2
      %s132 = smul.addr %s131, 8
      %s133 = scalar_lea.vmem %s2, %s132
      %p134 = scmp.lt.s32.totalorder %s13, 1
      %s135 = scalar_select %p134, %s13, 1
      %s136 = smul.addr %s135, 2
      %s137 = smul.addr %s136, 4
      %s138 = scalar_lea.vmem %s0, %s137
      %p139 = scmp.lt.s32.totalorder %s13, 1
      %s140 = scalar_select %p139, %s13, 1
      %s141 = smul.addr %s140, 2
      %s142 = smul.addr %s141, 8
      %s143 = scalar_lea.vmem %s2, %s142
      %v144 = vld [vmem:[%s138] sm:$0x77]
      %v145 = vld [vmem:[%s1] sm:$0xff]
      %v147 = vcombine.high %v144, %v144
      %vm148 = vcmask 23552
      %v150 = vsel %vm148, %v145, 0
      %vm152 = vcmask 1042432
      %v153 = vsel %vm152, %v144, 0
      %v155 = vsel %vm152, %v147, 0
      %157 = vmatprep.subr.mxu0 %v155
      %158 = vmatpush1.msra.mxu0 %v153
      %159 = vmatprep.subr.mxu0 0.0
      %160 = vmatpush1.msra.mxu0 0.0
      %161 = vmatprep.subr.mxu0 0.0
      %162 = vmatpush1.msra.mxu0 0.0
      %163 = vmatprep.subr.mxu0 0.0
      %164 = vmatpush1.msra.mxu0 0.0
      %165 = vmatprep.subr.mxu0 0.0
      %166 = vmatpush1.msra.mxu0 0.0
      %167 = vmatprep.subr.mxu0 0.0
      %168 = vmatpush1.msra.mxu0 0.0
      %169 = vmatprep.subr.mxu0 0.0
      %170 = vmatpush1.msra.mxu0 0.0
      %171 = vmatprep.subr.mxu0 0.0
      %172 = vmatpush1.msra.mxu0 0.0
      %173 = vmatprep.subr.mxu0 0.0
      %174 = vmatpush1.msra.mxu0 0.0
      %175 = vmatprep.subr.mxu0 0.0
      %176 = vmatpush1.msra.mxu0 0.0
      %177 = vmatprep.subr.mxu0 0.0
      %178 = vmatpush1.msra.mxu0 0.0
      %179 = vmatprep.subr.mxu0 0.0
      %180 = vmatpush1.msra.mxu0 0.0
      %181 = vmatprep.subr.mxu0 0.0
      %182 = vmatpush1.msra.mxu0 0.0
      %183 = vmatprep.subr.mxu0 0.0
      %184 = vmatpush1.msra.mxu0 0.0
      %185 = vmatprep.subr.mxu0 0.0
      %186 = vmatpush1.msra.mxu0 0.0
      %187 = vmatprep.subr.mxu0 0.0
      %188 = vmatpush1.msra.mxu0 0.0
      %189 = vmatprep.subr.mxu0 0.0
      %190 = vmatpush1.msra.mxu0 0.0
      %191 = vmatprep.subr.mxu0 0.0
      %192 = vmatpush1.msra.mxu0 0.0
      %193 = vmatprep.subr.mxu0 0.0
      %194 = vmatpush1.msra.mxu0 0.0
      %195 = vmatprep.subr.mxu0 0.0
      %196 = vmatpush1.msra.mxu0 0.0
      %197 = vmatprep.subr.mxu0 0.0
      %198 = vmatpush1.msra.mxu0 0.0
      %199 = vmatprep.subr.mxu0 0.0
      %200 = vmatpush1.msra.mxu0 0.0
      %201 = vmatprep.subr.mxu0 0.0
      %202 = vmatpush1.msra.mxu0 0.0
      %203 = vmatprep.subr.mxu0 0.0
      %204 = vmatpush1.msra.mxu0 0.0
      %205 = vmatprep.subr.mxu0 0.0
      %206 = vmatpush1.msra.mxu0 0.0
      %207 = vmatprep.subr.mxu0 0.0
      %208 = vmatpush1.msra.mxu0 0.0
      %209 = vmatprep.subr.mxu0 0.0
      %210 = vmatpush1.msra.mxu0 0.0
      %211 = vmatprep.subr.mxu0 0.0
      %212 = vmatpush1.msra.mxu0 0.0
      %213 = vmatprep.subr.mxu0 0.0
      %214 = vmatpush1.msra.mxu0 0.0
      %215 = vmatprep.subr.mxu0 0.0
      %216 = vmatpush1.msra.mxu0 0.0
      %217 = vmatprep.subr.mxu0 0.0
      %218 = vmatpush1.msra.mxu0 0.0
      %219 = vmatprep.subr.mxu0 0.0
      %220 = vmatpush1.msra.mxu0 0.0
      %221 = vmatprep.mubr.f32.mxu0 0.0
      %222 = vmatmul.mubr.f32.gmra.mrb[0].mxu0 %v150
      %v223 = vpop.f32.mrb[0].mxu0
      %v224 = vadd.f32 0.0, %v223
      %v225 = vpop.f32.mrb[0].mxu0
      %v226 = vadd.f32 0.0, %v225
      %227 = vdwg.mxu0
      %v228 = vmax.f32 %v224, 0.0
      %v229 = vmax.f32 %v226, 0.0
      %v230 = vld [vmem:[%s1 + $0x8] sm:$0xff]
      %v231 = vld [vmem:[%s1 + $0x10] sm:$0xff]
      %v232 = vld [vmem:[%s1 + $0x150] sm:$0xff]
      %v233 = vld [vmem:[%s1 + $0x158] sm:$0xff]
      %v234 = vld [vmem:[%s1 + $0x160] sm:$0xff]
      %v235 = vld [vmem:[%s1 + $0x168] sm:$0xff]
      %v236 = vld [vmem:[%s1 + $0x170] sm:$0xff]
      %v237 = vld [vmem:[%s1 + $0x178] sm:$0xff]
      %v238 = vld [vmem:[%s1 + $0x180] sm:$0xff]
      %v239 = vld [vmem:[%s1 + $0x188] sm:$0xff]
      %v240 = vld [vmem:[%s1 + $0x190] sm:$0xff]
      %v241 = vld [vmem:[%s1 + $0x198] sm:$0xff]
      %v242 = vld [vmem:[%s1 + $0x1a0] sm:$0xff]
      %v243 = vld [vmem:[%s1 + $0x1a8] sm:$0xff]
      %v244 = vld [vmem:[%s1 + $0x1b0] sm:$0xff]
      %v245 = vld [vmem:[%s1 + $0x1b8] sm:$0xff]
      %v246 = vld [vmem:[%s1 + $0x1c0] sm:$0xff]
      %v247 = vld [vmem:[%s1 + $0x1c8] sm:$0xff]
      %v248 = vld [vmem:[%s1 + $0x1d0] sm:$0xff]
      %v249 = vld [vmem:[%s1 + $0x1d8] sm:$0xff]
      %v250 = vld [vmem:[%s1 + $0x1e0] sm:$0xff]
      %v251 = vld [vmem:[%s1 + $0x1e8] sm:$0xff]
      %v252 = vld [vmem:[%s1 + $0x1f0] sm:$0xff]
      %v253 = vld [vmem:[%s1 + $0x1f8] sm:$0xff]
      %v254 = vld [vmem:[%s1 + $0x200] sm:$0xff]
      %v255 = vld [vmem:[%s1 + $0x208] sm:$0xff]
      %v256 = vld [vmem:[%s1 + $0x210] sm:$0xff]
      %v257 = vld [vmem:[%s1 + $0x218] sm:$0xff]
      %v258 = vld [vmem:[%s1 + $0x220] sm:$0xff]
      %v259 = vld [vmem:[%s1 + $0x228] sm:$0xff]
      %v260 = vld [vmem:[%s1 + $0x230] sm:$0xff]
      %v261 = vld [vmem:[%s1 + $0x238] sm:$0xff]
      %v262 = vld [vmem:[%s1 + $0x240] sm:$0xff]
      %v263 = vld [vmem:[%s1 + $0x248] sm:$0xff]
      %264 = vmatprep.subr.mxu0 0.0
      %265 = vmatpush1.msra.mxu0 %v232
      %266 = vmatprep.subr.mxu0 0.0
      %267 = vmatpush1.msra.mxu0 %v233
      %268 = vmatprep.subr.mxu0 0.0
      %269 = vmatpush1.msra.mxu0 %v234
      %270 = vmatprep.subr.mxu0 0.0
      %271 = vmatpush1.msra.mxu0 %v235
      %272 = vmatprep.subr.mxu0 0.0
      %273 = vmatpush1.msra.mxu0 %v236
      %274 = vmatprep.subr.mxu0 0.0
      %275 = vmatpush1.msra.mxu0 %v237
      %276 = vmatprep.subr.mxu0 0.0
      %277 = vmatpush1.msra.mxu0 %v238
      %278 = vmatprep.subr.mxu0 0.0
      %279 = vmatpush1.msra.mxu0 %v239
      %280 = vmatprep.subr.mxu0 0.0
      %281 = vmatpush1.msra.mxu0 %v240
      %282 = vmatprep.subr.mxu0 0.0
      %283 = vmatpush1.msra.mxu0 %v241
      %284 = vmatprep.subr.mxu0 0.0
      %285 = vmatpush1.msra.mxu0 %v242
      %286 = vmatprep.subr.mxu0 0.0
      %287 = vmatpush1.msra.mxu0 %v243
      %288 = vmatprep.subr.mxu0 0.0
      %289 = vmatpush1.msra.mxu0 %v244
      %290 = vmatprep.subr.mxu0 0.0
      %291 = vmatpush1.msra.mxu0 %v245
      %292 = vmatprep.subr.mxu0 0.0
      %293 = vmatpush1.msra.mxu0 %v246
      %294 = vmatprep.subr.mxu0 0.0
      %295 = vmatpush1.msra.mxu0 %v247
      %296 = vmatprep.subr.mxu0 0.0
      %297 = vmatpush1.msra.mxu0 %v248
      %298 = vmatprep.subr.mxu0 0.0
      %299 = vmatpush1.msra.mxu0 %v249
      %300 = vmatprep.subr.mxu0 0.0
      %301 = vmatpush1.msra.mxu0 %v250
      %302 = vmatprep.subr.mxu0 0.0
      %303 = vmatpush1.msra.mxu0 %v251
      %304 = vmatprep.subr.mxu0 0.0
      %305 = vmatpush1.msra.mxu0 %v252
      %306 = vmatprep.subr.mxu0 0.0
      %307 = vmatpush1.msra.mxu0 %v253
      %308 = vmatprep.subr.mxu0 0.0
      %309 = vmatpush1.msra.mxu0 %v254
      %310 = vmatprep.subr.mxu0 0.0
      %311 = vmatpush1.msra.mxu0 %v255
      %312 = vmatprep.subr.mxu0 0.0
      %313 = vmatpush1.msra.mxu0 %v256
      %314 = vmatprep.subr.mxu0 0.0
      %315 = vmatpush1.msra.mxu0 %v257
      %316 = vmatprep.subr.mxu0 0.0
      %317 = vmatpush1.msra.mxu0 %v258
      %318 = vmatprep.subr.mxu0 0.0
      %319 = vmatpush1.msra.mxu0 %v259
      %320 = vmatprep.subr.mxu0 0.0
      %321 = vmatpush1.msra.mxu0 %v260
      %322 = vmatprep.subr.mxu0 0.0
      %323 = vmatpush1.msra.mxu0 %v261
      %324 = vmatprep.subr.mxu0 0.0
      %325 = vmatpush1.msra.mxu0 %v262
      %326 = vmatprep.subr.mxu0 0.0
      %327 = vmatpush1.msra.mxu0 %v263
      %328 = vmatprep.mubr.f32.mxu0 %v229
      %329 = vmatmul.mubr.f32.gmra.mrb[0].mxu0 %v228
      %v330 = vpop.f32.mrb[0].mxu0
      %v331 = vadd.f32 0.0, %v330
      %v332 = vpop.f32.mrb[0].mxu0
      %333 = vdwg.mxu0
      %vm334 = vcmask 64512
      %v336 = vsel %vm334, %v230, 0
      %v339 = vsel %vm334, %v231, 0
      %341 = vmatprep.subr.mxu0 0.0
      %342 = vmatpush1.msra.mxu0 %v331
      %343 = vmatprep.subr.mxu0 0.0
      %344 = vmatpush1.msra.mxu0 0.0
      %345 = vmatprep.subr.mxu0 0.0
      %346 = vmatpush1.msra.mxu0 0.0
      %347 = vmatprep.subr.mxu0 0.0
      %348 = vmatpush1.msra.mxu0 0.0
      %349 = vmatprep.subr.mxu0 0.0
      %350 = vmatpush1.msra.mxu0 0.0
      %351 = vmatprep.subr.mxu0 0.0
      %352 = vmatpush1.msra.mxu0 0.0
      %353 = vmatprep.subr.mxu0 0.0
      %354 = vmatpush1.msra.mxu0 0.0
      %355 = vmatprep.subr.mxu0 0.0
      %356 = vmatpush1.msra.mxu0 0.0
      %357 = vmatprep.subr.mxu0 0.0
      %358 = vmatpush1.msra.mxu0 0.0
      %359 = vmatprep.subr.mxu0 0.0
      %360 = vmatpush1.msra.mxu0 0.0
      %361 = vmatprep.subr.mxu0 0.0
      %362 = vmatpush1.msra.mxu0 0.0
      %363 = vmatprep.subr.mxu0 0.0
      %364 = vmatpush1.msra.mxu0 0.0
      %365 = vmatprep.subr.mxu0 0.0
      %366 = vmatpush1.msra.mxu0 0.0
      %367 = vmatprep.subr.mxu0 0.0
      %368 = vmatpush1.msra.mxu0 0.0
      %369 = vmatprep.subr.mxu0 0.0
      %370 = vmatpush1.msra.mxu0 0.0
      %371 = vmatprep.subr.mxu0 0.0
      %372 = vmatpush1.msra.mxu0 0.0
      %373 = vmatprep.subr.mxu0 0.0
      %374 = vmatpush1.msra.mxu0 0.0
      %375 = vmatprep.subr.mxu0 0.0
      %376 = vmatpush1.msra.mxu0 0.0
      %377 = vmatprep.subr.mxu0 0.0
      %378 = vmatpush1.msra.mxu0 0.0
      %379 = vmatprep.subr.mxu0 0.0
      %380 = vmatpush1.msra.mxu0 0.0
      %381 = vmatprep.subr.mxu0 0.0
      %382 = vmatpush1.msra.mxu0 0.0
      %383 = vmatprep.subr.mxu0 0.0
      %384 = vmatpush1.msra.mxu0 0.0
      %385 = vmatprep.subr.mxu0 0.0
      %386 = vmatpush1.msra.mxu0 0.0
      %387 = vmatprep.subr.mxu0 0.0
      %388 = vmatpush1.msra.mxu0 0.0
      %389 = vmatprep.subr.mxu0 0.0
      %390 = vmatpush1.msra.mxu0 0.0
      %391 = vmatprep.subr.mxu0 0.0
      %392 = vmatpush1.msra.mxu0 0.0
      %393 = vmatprep.subr.mxu0 0.0
      %394 = vmatpush1.msra.mxu0 0.0
      %395 = vmatprep.subr.mxu0 0.0
      %396 = vmatpush1.msra.mxu0 0.0
      %397 = vmatprep.subr.mxu0 0.0
      %398 = vmatpush1.msra.mxu0 0.0
      %399 = vmatprep.subr.mxu0 0.0
      %400 = vmatpush1.msra.mxu0 0.0
      %401 = vmatprep.subr.mxu0 0.0
      %402 = vmatpush1.msra.mxu0 0.0
      %403 = vmatprep.subr.mxu0 0.0
      %404 = vmatpush1.msra.mxu0 0.0
      %405 = vmatprep.mubr.f32.mxu0 0.0
      %406 = vmatmul.mubr.f32.gmra.mrb[0].mxu0 %v336
      %v407 = vpop.f32.mrb[0].mxu0
      %v408 = vadd.f32 0.0, %v407
      %v409 = vpop.f32.mrb[0].mxu0
      %410 = vmatprep.mubr.f32.mxu0 0.0
      %411 = vmatmul.mubr.f32.gmra.mrb[0].mxu0 %v339
      %v412 = vpop.f32.mrb[0].mxu0
      %v413 = vadd.f32 0.0, %v412
      %v414 = vpop.f32.mrb[0].mxu0
      %415 = vdwg.mxu0
      %v416 = vmax.f32 %v408, 0.0
      %v417 = vmax.f32 %v413, 0.0
      %v418 = vld [vmem:[%s1 + $0x18] sm:$0xff]
      %v419 = vld [vmem:[%s1 + $0x20] sm:$0xff]
      %v420 = vld [vmem:[%s1 + $0x28] sm:$0xff]
      %v421 = vld [vmem:[%s1 + $0x30] sm:$0xff]
      %v422 = vld [vmem:[%s1 + $0x250] sm:$0xff]
      %v423 = vld [vmem:[%s1 + $0x258] sm:$0xff]
      %v424 = vld [vmem:[%s1 + $0x260] sm:$0xff]
      %v425 = vld [vmem:[%s1 + $0x268] sm:$0xff]
      %v426 = vld [vmem:[%s1 + $0x270] sm:$0xff]
      %v427 = vld [vmem:[%s1 + $0x278] sm:$0xff]
      %v428 = vld [vmem:[%s1 + $0x280] sm:$0xff]
      %v429 = vld [vmem:[%s1 + $0x288] sm:$0xff]
      %vm430 = vcmask 523264
      %v432 = vsel %vm430, %v416, 0
      %v435 = vsel %vm430, %v417, 0
      %437 = vmatprep.subr.mxu0 0.0
      %438 = vmatpush1.msra.mxu0 %v422
      %439 = vmatprep.subr.mxu0 0.0
      %440 = vmatpush1.msra.mxu0 %v423
      %441 = vmatprep.subr.mxu0 0.0
      %442 = vmatpush1.msra.mxu0 %v424
      %443 = vmatprep.subr.mxu0 0.0
      %444 = vmatpush1.msra.mxu0 %v425
      %445 = vmatprep.subr.mxu0 0.0
      %446 = vmatpush1.msra.mxu0 %v426
      %447 = vmatprep.subr.mxu0 0.0
      %448 = vmatpush1.msra.mxu0 %v427
      %449 = vmatprep.subr.mxu0 0.0
      %450 = vmatpush1.msra.mxu0 %v428
      %451 = vmatprep.subr.mxu0 0.0
      %452 = vmatpush1.msra.mxu0 %v429
      %453 = vmatprep.subr.mxu0 0.0
      %454 = vmatpush1.msra.mxu0 0.0
      %455 = vmatprep.subr.mxu0 0.0
      %456 = vmatpush1.msra.mxu0 0.0
      %457 = vmatprep.subr.mxu0 0.0
      %458 = vmatpush1.msra.mxu0 0.0
      %459 = vmatprep.subr.mxu0 0.0
      %460 = vmatpush1.msra.mxu0 0.0
      %461 = vmatprep.subr.mxu0 0.0
      %462 = vmatpush1.msra.mxu0 0.0
      %463 = vmatprep.subr.mxu0 0.0
      %464 = vmatpush1.msra.mxu0 0.0
      %465 = vmatprep.subr.mxu0 0.0
      %466 = vmatpush1.msra.mxu0 0.0
      %467 = vmatprep.subr.mxu0 0.0
      %468 = vmatpush1.msra.mxu0 0.0
      %469 = vmatprep.subr.mxu0 0.0
      %470 = vmatpush1.msra.mxu0 0.0
      %471 = vmatprep.subr.mxu0 0.0
      %472 = vmatpush1.msra.mxu0 0.0
      %473 = vmatprep.subr.mxu0 0.0
      %474 = vmatpush1.msra.mxu0 0.0
      %475 = vmatprep.subr.mxu0 0.0
      %476 = vmatpush1.msra.mxu0 0.0
      %477 = vmatprep.subr.mxu0 0.0
      %478 = vmatpush1.msra.mxu0 0.0
      %479 = vmatprep.subr.mxu0 0.0
      %480 = vmatpush1.msra.mxu0 0.0
      %481 = vmatprep.subr.mxu0 0.0
      %482 = vmatpush1.msra.mxu0 0.0
      %483 = vmatprep.subr.mxu0 0.0
      %484 = vmatpush1.msra.mxu0 0.0
      %485 = vmatprep.subr.mxu0 0.0
      %486 = vmatpush1.msra.mxu0 0.0
      %487 = vmatprep.subr.mxu0 0.0
      %488 = vmatpush1.msra.mxu0 0.0
      %489 = vmatprep.subr.mxu0 0.0
      %490 = vmatpush1.msra.mxu0 0.0
      %491 = vmatprep.subr.mxu0 0.0
      %492 = vmatpush1.msra.mxu0 0.0
      %493 = vmatprep.subr.mxu0 0.0
      %494 = vmatpush1.msra.mxu0 0.0
      %495 = vmatprep.subr.mxu0 0.0
      %496 = vmatpush1.msra.mxu0 0.0
      %497 = vmatprep.subr.mxu0 0.0
      %498 = vmatpush1.msra.mxu0 0.0
      %499 = vmatprep.subr.mxu0 0.0
      %500 = vmatpush1.msra.mxu0 0.0
      %501 = vmatprep.mubr.f32.mxu0 0.0
      %502 = vmatmul.mubr.f32.gmra.mrb[0].mxu0 %v432
      %v503 = vpop.f32.mrb[0].mxu0
      %v504 = vadd.f32 0.0, %v503
      %v505 = vpop.f32.mrb[0].mxu0
      %506 = vmatprep.mubr.f32.mxu0 0.0
      %507 = vmatmul.mubr.f32.gmra.mrb[0].mxu0 %v435
      %v508 = vpop.f32.mrb[0].mxu0
      %v509 = vadd.f32 0.0, %v508
      %v510 = vpop.f32.mrb[0].mxu0
      %511 = vdwg.mxu0
      %vm512 = vcmask 130048
      %v514 = vsel %vm512, %v418, 0
      %v517 = vsel %vm512, %v419, 0
      %v520 = vsel %vm512, %v420, 0
      %v523 = vsel %vm512, %v421, 0
      %525 = vmatprep.subr.mxu0 0.0
      %526 = vmatpush1.msra.mxu0 %v504
      %527 = vmatprep.subr.mxu0 0.0
      %528 = vmatpush1.msra.mxu0 %v509
      %529 = vmatprep.subr.mxu0 0.0
      %530 = vmatpush1.msra.mxu0 0.0
      %531 = vmatprep.subr.mxu0 0.0
      %532 = vmatpush1.msra.mxu0 0.0
      %533 = vmatprep.subr.mxu0 0.0
      %534 = vmatpush1.msra.mxu0 0.0
      %535 = vmatprep.subr.mxu0 0.0
      %536 = vmatpush1.msra.mxu0 0.0
      %537 = vmatprep.subr.mxu0 0.0
      %538 = vmatpush1.msra.mxu0 0.0
      %539 = vmatprep.subr.mxu0 0.0
      %540 = vmatpush1.msra.mxu0 0.0
      %541 = vmatprep.subr.mxu0 0.0
      %542 = vmatpush1.msra.mxu0 0.0
      %543 = vmatprep.subr.mxu0 0.0
      %544 = vmatpush1.msra.mxu0 0.0
      %545 = vmatprep.subr.mxu0 0.0
      %546 = vmatpush1.msra.mxu0 0.0
      %547 = vmatprep.subr.mxu0 0.0
      %548 = vmatpush1.msra.mxu0 0.0
      %549 = vmatprep.subr.mxu0 0.0
      %550 = vmatpush1.msra.mxu0 0.0
      %551 = vmatprep.subr.mxu0 0.0
      %552 = vmatpush1.msra.mxu0 0.0
      %553 = vmatprep.subr.mxu0 0.0
      %554 = vmatpush1.msra.mxu0 0.0
      %555 = vmatprep.subr.mxu0 0.0
      %556 = vmatpush1.msra.mxu0 0.0
      %557 = vmatprep.subr.mxu0 0.0
      %558 = vmatpush1.msra.mxu0 0.0
      %559 = vmatprep.subr.mxu0 0.0
      %560 = vmatpush1.msra.mxu0 0.0
      %561 = vmatprep.subr.mxu0 0.0
      %562 = vmatpush1.msra.mxu0 0.0
      %563 = vmatprep.subr.mxu0 0.0
      %564 = vmatpush1.msra.mxu0 0.0
      %565 = vmatprep.subr.mxu0 0.0
      %566 = vmatpush1.msra.mxu0 0.0
      %567 = vmatprep.subr.mxu0 0.0
      %568 = vmatpush1.msra.mxu0 0.0
      %569 = vmatprep.subr.mxu0 0.0
      %570 = vmatpush1.msra.mxu0 0.0
      %571 = vmatprep.subr.mxu0 0.0
      %572 = vmatpush1.msra.mxu0 0.0
      %573 = vmatprep.subr.mxu0 0.0
      %574 = vmatpush1.msra.mxu0 0.0
      %575 = vmatprep.subr.mxu0 0.0
      %576 = vmatpush1.msra.mxu0 0.0
      %577 = vmatprep.subr.mxu0 0.0
      %578 = vmatpush1.msra.mxu0 0.0
      %579 = vmatprep.subr.mxu0 0.0
      %580 = vmatpush1.msra.mxu0 0.0
      %581 = vmatprep.subr.mxu0 0.0
      %582 = vmatpush1.msra.mxu0 0.0
      %583 = vmatprep.subr.mxu0 0.0
      %584 = vmatpush1.msra.mxu0 0.0
      %585 = vmatprep.subr.mxu0 0.0
      %586 = vmatpush1.msra.mxu0 0.0
      %587 = vmatprep.subr.mxu0 0.0
      %588 = vmatpush1.msra.mxu0 0.0
      %589 = vmatprep.mubr.f32.mxu0 0.0
      %590 = vmatmul.mubr.f32.gmra.mrb[0].mxu0 %v514
      %v591 = vpop.f32.mrb[0].mxu0
      %v592 = vadd.f32 0.0, %v591
      %v593 = vpop.f32.mrb[0].mxu0
      %594 = vmatprep.mubr.f32.mxu0 0.0
      %595 = vmatmul.mubr.f32.gmra.mrb[0].mxu0 %v517
      %v596 = vpop.f32.mrb[0].mxu0
      %v597 = vadd.f32 0.0, %v596
      %v598 = vpop.f32.mrb[0].mxu0
      %599 = vmatprep.mubr.f32.mxu0 0.0
      %600 = vmatmul.mubr.f32.gmra.mrb[0].mxu0 %v520
      %v601 = vpop.f32.mrb[0].mxu0
      %v602 = vadd.f32 0.0, %v601
      %v603 = vpop.f32.mrb[0].mxu0
      %604 = vmatprep.mubr.f32.mxu0 0.0
      %605 = vmatmul.mubr.f32.gmra.mrb[0].mxu0 %v523
      %v606 = vpop.f32.mrb[0].mxu0
      %v607 = vadd.f32 0.0, %v606
      %v608 = vpop.f32.mrb[0].mxu0
      %609 = vdwg.mxu0
      %v610 = vmax.f32 %v592, 0.0
      %v611 = vmax.f32 %v597, 0.0
      %v612 = vmax.f32 %v602, 0.0
      %v613 = vmax.f32 %v607, 0.0
      %v614 = vld [vmem:[%s1 + $0x38] sm:$0xff]
      %v615 = vld [vmem:[%s1 + $0x40] sm:$0xff]
      %v616 = vld [vmem:[%s1 + $0x48] sm:$0xff]
      %v617 = vld [vmem:[%s1 + $0x50] sm:$0xff]
      %v618 = vld [vmem:[%s1 + $0x290] sm:$0xff]
      %v619 = vld [vmem:[%s1 + $0x298] sm:$0xff]
      %v621 = vsel %vm512, %v610, 0
      %v624 = vsel %vm512, %v611, 0
      %v627 = vsel %vm512, %v612, 0
      %v630 = vsel %vm512, %v613, 0
      %632 = vmatprep.subr.mxu0 0.0
      %633 = vmatpush1.msra.mxu0 %v618
      %634 = vmatprep.subr.mxu0 0.0
      %635 = vmatpush1.msra.mxu0 %v619
      %636 = vmatprep.subr.mxu0 0.0
      %637 = vmatpush1.msra.mxu0 0.0
      %638 = vmatprep.subr.mxu0 0.0
      %639 = vmatpush1.msra.mxu0 0.0
      %640 = vmatprep.subr.mxu0 0.0
      %641 = vmatpush1.msra.mxu0 0.0
      %642 = vmatprep.subr.mxu0 0.0
      %643 = vmatpush1.msra.mxu0 0.0
      %644 = vmatprep.subr.mxu0 0.0
      %645 = vmatpush1.msra.mxu0 0.0
      %646 = vmatprep.subr.mxu0 0.0
      %647 = vmatpush1.msra.mxu0 0.0
      %648 = vmatprep.subr.mxu0 0.0
      %649 = vmatpush1.msra.mxu0 0.0
      %650 = vmatprep.subr.mxu0 0.0
      %651 = vmatpush1.msra.mxu0 0.0
      %652 = vmatprep.subr.mxu0 0.0
      %653 = vmatpush1.msra.mxu0 0.0
      %654 = vmatprep.subr.mxu0 0.0
      %655 = vmatpush1.msra.mxu0 0.0
      %656 = vmatprep.subr.mxu0 0.0
      %657 = vmatpush1.msra.mxu0 0.0
      %658 = vmatprep.subr.mxu0 0.0
      %659 = vmatpush1.msra.mxu0 0.0
      %660 = vmatprep.subr.mxu0 0.0
      %661 = vmatpush1.msra.mxu0 0.0
      %662 = vmatprep.subr.mxu0 0.0
      %663 = vmatpush1.msra.mxu0 0.0
      %664 = vmatprep.subr.mxu0 0.0
      %665 = vmatpush1.msra.mxu0 0.0
      %666 = vmatprep.subr.mxu0 0.0
      %667 = vmatpush1.msra.mxu0 0.0
      %668 = vmatprep.subr.mxu0 0.0
      %669 = vmatpush1.msra.mxu0 0.0
      %670 = vmatprep.subr.mxu0 0.0
      %671 = vmatpush1.msra.mxu0 0.0
      %672 = vmatprep.subr.mxu0 0.0
      %673 = vmatpush1.msra.mxu0 0.0
      %674 = vmatprep.subr.mxu0 0.0
      %675 = vmatpush1.msra.mxu0 0.0
      %676 = vmatprep.subr.mxu0 0.0
      %677 = vmatpush1.msra.mxu0 0.0
      %678 = vmatprep.subr.mxu0 0.0
      %679 = vmatpush1.msra.mxu0 0.0
      %680 = vmatprep.subr.mxu0 0.0
      %681 = vmatpush1.msra.mxu0 0.0
      %682 = vmatprep.subr.mxu0 0.0
      %683 = vmatpush1.msra.mxu0 0.0
      %684 = vmatprep.subr.mxu0 0.0
      %685 = vmatpush1.msra.mxu0 0.0
      %686 = vmatprep.subr.mxu0 0.0
      %687 = vmatpush1.msra.mxu0 0.0
      %688 = vmatprep.subr.mxu0 0.0
      %689 = vmatpush1.msra.mxu0 0.0
      %690 = vmatprep.subr.mxu0 0.0
      %691 = vmatpush1.msra.mxu0 0.0
      %692 = vmatprep.subr.mxu0 0.0
      %693 = vmatpush1.msra.mxu0 0.0
      %694 = vmatprep.subr.mxu0 0.0
      %695 = vmatpush1.msra.mxu0 0.0
      %696 = vmatprep.mubr.f32.mxu0 0.0
      %697 = vmatmul.mubr.f32.gmra.mrb[0].mxu0 %v621
      %v698 = vpop.f32.mrb[0].mxu0
      %v699 = vadd.f32 0.0, %v698
      %v700 = vpop.f32.mrb[0].mxu0
      %701 = vmatprep.mubr.f32.mxu0 0.0
      %702 = vmatmul.mubr.f32.gmra.mrb[0].mxu0 %v624
      %v703 = vpop.f32.mrb[0].mxu0
      %v704 = vadd.f32 0.0, %v703
      %v705 = vpop.f32.mrb[0].mxu0
      %706 = vmatprep.mubr.f32.mxu0 0.0
      %707 = vmatmul.mubr.f32.gmra.mrb[0].mxu0 %v627
      %v708 = vpop.f32.mrb[0].mxu0
      %v709 = vadd.f32 0.0, %v708
      %v710 = vpop.f32.mrb[0].mxu0
      %711 = vmatprep.mubr.f32.mxu0 0.0
      %712 = vmatmul.mubr.f32.gmra.mrb[0].mxu0 %v630
      %v713 = vpop.f32.mrb[0].mxu0
      %v714 = vadd.f32 0.0, %v713
      %v715 = vpop.f32.mrb[0].mxu0
      %716 = vdwg.mxu0
      %vm717 = vcmask 261120
      %v719 = vsel %vm717, %v614, 0
      %v722 = vsel %vm717, %v615, 0
      %v725 = vsel %vm717, %v616, 0
      %v728 = vsel %vm717, %v617, 0
      %730 = vmatprep.subr.mxu0 0.0
      %731 = vmatpush1.msra.mxu0 %v699
      %732 = vmatprep.subr.mxu0 0.0
      %733 = vmatpush1.msra.mxu0 %v704
      %734 = vmatprep.subr.mxu0 0.0
      %735 = vmatpush1.msra.mxu0 %v709
      %736 = vmatprep.subr.mxu0 0.0
      %737 = vmatpush1.msra.mxu0 %v714
      %738 = vmatprep.subr.mxu0 0.0
      %739 = vmatpush1.msra.mxu0 0.0
      %740 = vmatprep.subr.mxu0 0.0
      %741 = vmatpush1.msra.mxu0 0.0
      %742 = vmatprep.subr.mxu0 0.0
      %743 = vmatpush1.msra.mxu0 0.0
      %744 = vmatprep.subr.mxu0 0.0
      %745 = vmatpush1.msra.mxu0 0.0
      %746 = vmatprep.subr.mxu0 0.0
      %747 = vmatpush1.msra.mxu0 0.0
      %748 = vmatprep.subr.mxu0 0.0
      %749 = vmatpush1.msra.mxu0 0.0
      %750 = vmatprep.subr.mxu0 0.0
      %751 = vmatpush1.msra.mxu0 0.0
      %752 = vmatprep.subr.mxu0 0.0
      %753 = vmatpush1.msra.mxu0 0.0
      %754 = vmatprep.subr.mxu0 0.0
      %755 = vmatpush1.msra.mxu0 0.0
      %756 = vmatprep.subr.mxu0 0.0
      %757 = vmatpush1.msra.mxu0 0.0
      %758 = vmatprep.subr.mxu0 0.0
      %759 = vmatpush1.msra.mxu0 0.0
      %760 = vmatprep.subr.mxu0 0.0
      %761 = vmatpush1.msra.mxu0 0.0
      %762 = vmatprep.subr.mxu0 0.0
      %763 = vmatpush1.msra.mxu0 0.0
      %764 = vmatprep.subr.mxu0 0.0
      %765 = vmatpush1.msra.mxu0 0.0
      %766 = vmatprep.subr.mxu0 0.0
      %767 = vmatpush1.msra.mxu0 0.0
      %768 = vmatprep.subr.mxu0 0.0
      %769 = vmatpush1.msra.mxu0 0.0
      %770 = vmatprep.subr.mxu0 0.0
      %771 = vmatpush1.msra.mxu0 0.0
      %772 = vmatprep.subr.mxu0 0.0
      %773 = vmatpush1.msra.mxu0 0.0
      %774 = vmatprep.subr.mxu0 0.0
      %775 = vmatpush1.msra.mxu0 0.0
      %776 = vmatprep.subr.mxu0 0.0
      %777 = vmatpush1.msra.mxu0 0.0
      %778 = vmatprep.subr.mxu0 0.0
      %779 = vmatpush1.msra.mxu0 0.0
      %780 = vmatprep.subr.mxu0 0.0
      %781 = vmatpush1.msra.mxu0 0.0
      %782 = vmatprep.subr.mxu0 0.0
      %783 = vmatpush1.msra.mxu0 0.0
      %784 = vmatprep.subr.mxu0 0.0
      %785 = vmatpush1.msra.mxu0 0.0
      %786 = vmatprep.subr.mxu0 0.0
      %787 = vmatpush1.msra.mxu0 0.0
      %788 = vmatprep.subr.mxu0 0.0
      %789 = vmatpush1.msra.mxu0 0.0
      %790 = vmatprep.subr.mxu0 0.0
      %791 = vmatpush1.msra.mxu0 0.0
      %792 = vmatprep.subr.mxu0 0.0
      %793 = vmatpush1.msra.mxu0 0.0
      %794 = vmatprep.mubr.f32.mxu0 0.0
      %795 = vmatmul.mubr.f32.gmra.mrb[0].mxu0 %v719
      %v796 = vpop.f32.mrb[0].mxu0
      %v797 = vadd.f32 0.0, %v796
      %v798 = vpop.f32.mrb[0].mxu0
      %799 = vmatprep.mubr.f32.mxu0 0.0
      %800 = vmatmul.mubr.f32.gmra.mrb[0].mxu0 %v722
      %v801 = vpop.f32.mrb[0].mxu0
      %v802 = vadd.f32 0.0, %v801
      %v803 = vpop.f32.mrb[0].mxu0
      %804 = vmatprep.mubr.f32.mxu0 0.0
      %805 = vmatmul.mubr.f32.gmra.mrb[0].mxu0 %v725
      %v806 = vpop.f32.mrb[0].mxu0
      %v807 = vadd.f32 0.0, %v806
      %v808 = vpop.f32.mrb[0].mxu0
      %809 = vmatprep.mubr.f32.mxu0 0.0
      %810 = vmatmul.mubr.f32.gmra.mrb[0].mxu0 %v728
      %v811 = vpop.f32.mrb[0].mxu0
      %v812 = vadd.f32 0.0, %v811
      %v813 = vpop.f32.mrb[0].mxu0
      %814 = vdwg.mxu0
      %v815 = vmax.f32 %v797, 0.0
      %v816 = vmax.f32 %v802, 0.0
      %v817 = vmax.f32 %v807, 0.0
      %v818 = vmax.f32 %v812, 0.0
      %vm819 = vcmask 31744
      %v820 = vsel %vm819, %v815, 0.0
      %821 = vadd.xlane.f32.xlu0 %v820
      %v822 = vpop.xlane.xlu0 %821
      %v823 = vsel %vm819, %v816, 0.0
      %824 = vadd.xlane.f32.xlu0 %v823
      %v825 = vpop.xlane.xlu0 %824
      %v826 = vsel %vm819, %v817, 0.0
      %827 = vadd.xlane.f32.xlu0 %v826
      %v828 = vpop.xlane.xlu0 %827
      %v829 = vsel %vm819, %v818, 0.0
      %830 = vadd.xlane.f32.xlu0 %v829
      %v831 = vpop.xlane.xlu0 %830
      %v832 = vrcp.pop 4.0
      %v833 = vmul.f32 %v822, %v832
      %v834 = vmul.f32 %v825, %v832
      %v835 = vmul.f32 %v828, %v832
      %v836 = vmul.f32 %v831, %v832
      %v837 = vld [vmem:[%s1 + $0x58] sm:$0xff]
      %v838 = vld [vmem:[%s1 + $0x60] sm:$0xff]
      %v839 = vld [vmem:[%s1 + $0x68] sm:$0xff]
      %v840 = vld [vmem:[%s1 + $0x70] sm:$0xff]
      %v842 = vsel %vm334, %v837, 0
      %v845 = vsel %vm334, %v838, 0
      %v848 = vsel %vm334, %v839, 0
      %v851 = vsel %vm334, %v840, 0
      %853 = vmatprep.subr.mxu0 %v229
      %854 = vmatpush1.msra.mxu0 %v228
      %855 = vmatprep.subr.mxu0 0.0
      %856 = vmatpush1.msra.mxu0 0.0
      %857 = vmatprep.subr.mxu0 0.0
      %858 = vmatpush1.msra.mxu0 0.0
      %859 = vmatprep.subr.mxu0 0.0
      %860 = vmatpush1.msra.mxu0 0.0
      %861 = vmatprep.subr.mxu0 0.0
      %862 = vmatpush1.msra.mxu0 0.0
      %863 = vmatprep.subr.mxu0 0.0
      %864 = vmatpush1.msra.mxu0 0.0
      %865 = vmatprep.subr.mxu0 0.0
      %866 = vmatpush1.msra.mxu0 0.0
      %867 = vmatprep.subr.mxu0 0.0
      %868 = vmatpush1.msra.mxu0 0.0
      %869 = vmatprep.subr.mxu0 0.0
      %870 = vmatpush1.msra.mxu0 0.0
      %871 = vmatprep.subr.mxu0 0.0
      %872 = vmatpush1.msra.mxu0 0.0
      %873 = vmatprep.subr.mxu0 0.0
      %874 = vmatpush1.msra.mxu0 0.0
      %875 = vmatprep.subr.mxu0 0.0
      %876 = vmatpush1.msra.mxu0 0.0
      %877 = vmatprep.subr.mxu0 0.0
      %878 = vmatpush1.msra.mxu0 0.0
      %879 = vmatprep.subr.mxu0 0.0
      %880 = vmatpush1.msra.mxu0 0.0
      %881 = vmatprep.subr.mxu0 0.0
      %882 = vmatpush1.msra.mxu0 0.0
      %883 = vmatprep.subr.mxu0 0.0
      %884 = vmatpush1.msra.mxu0 0.0
      %885 = vmatprep.subr.mxu0 0.0
      %886 = vmatpush1.msra.mxu0 0.0
      %887 = vmatprep.subr.mxu0 0.0
      %888 = vmatpush1.msra.mxu0 0.0
      %889 = vmatprep.subr.mxu0 0.0
      %890 = vmatpush1.msra.mxu0 0.0
      %891 = vmatprep.subr.mxu0 0.0
      %892 = vmatpush1.msra.mxu0 0.0
      %893 = vmatprep.subr.mxu0 0.0
      %894 = vmatpush1.msra.mxu0 0.0
      %895 = vmatprep.subr.mxu0 0.0
      %896 = vmatpush1.msra.mxu0 0.0
      %897 = vmatprep.subr.mxu0 0.0
      %898 = vmatpush1.msra.mxu0 0.0
      %899 = vmatprep.subr.mxu0 0.0
      %900 = vmatpush1.msra.mxu0 0.0
      %901 = vmatprep.subr.mxu0 0.0
      %902 = vmatpush1.msra.mxu0 0.0
      %903 = vmatprep.subr.mxu0 0.0
      %904 = vmatpush1.msra.mxu0 0.0
      %905 = vmatprep.subr.mxu0 0.0
      %906 = vmatpush1.msra.mxu0 0.0
      %907 = vmatprep.subr.mxu0 0.0
      %908 = vmatpush1.msra.mxu0 0.0
      %909 = vmatprep.subr.mxu0 0.0
      %910 = vmatpush1.msra.mxu0 0.0
      %911 = vmatprep.subr.mxu0 0.0
      %912 = vmatpush1.msra.mxu0 0.0
      %913 = vmatprep.subr.mxu0 0.0
      %914 = vmatpush1.msra.mxu0 0.0
      %915 = vmatprep.subr.mxu0 0.0
      %916 = vmatpush1.msra.mxu0 0.0
      %917 = vmatprep.mubr.f32.mxu0 0.0
      %918 = vmatmul.mubr.f32.gmra.mrb[0].mxu0 %v842
      %v919 = vpop.f32.mrb[0].mxu0
      %v920 = vadd.f32 0.0, %v919
      %v921 = vpop.f32.mrb[0].mxu0
      %v922 = vadd.f32 0.0, %v921
      %923 = vmatprep.mubr.f32.mxu0 0.0
      %924 = vmatmul.mubr.f32.gmra.mrb[0].mxu0 %v845
      %v925 = vpop.f32.mrb[0].mxu0
      %v926 = vadd.f32 0.0, %v925
      %v927 = vpop.f32.mrb[0].mxu0
      %v928 = vadd.f32 0.0, %v927
      %929 = vmatprep.mubr.f32.mxu0 0.0
      %930 = vmatmul.mubr.f32.gmra.mrb[0].mxu0 %v848
      %v931 = vpop.f32.mrb[0].mxu0
      %v932 = vadd.f32 0.0, %v931
      %v933 = vpop.f32.mrb[0].mxu0
      %v934 = vadd.f32 0.0, %v933
      %935 = vmatprep.mubr.f32.mxu0 0.0
      %936 = vmatmul.mubr.f32.gmra.mrb[0].mxu0 %v851
      %v937 = vpop.f32.mrb[0].mxu0
      %v938 = vadd.f32 0.0, %v937
      %v939 = vpop.f32.mrb[0].mxu0
      %v940 = vadd.f32 0.0, %v939
      %941 = vdwg.mxu0
      %v942 = vld [vmem:[%s1 + $0x78] sm:$0xff]
      %v943 = vld [vmem:[%s1 + $0x80] sm:$0xff]
      %v944 = vld [vmem:[%s1 + $0x88] sm:$0xff]
      %v945 = vld [vmem:[%s1 + $0x90] sm:$0xff]
      %v947 = vsel %vm512, %v942, 0
      %v950 = vsel %vm512, %v943, 0
      %v953 = vsel %vm512, %v944, 0
      %v956 = vsel %vm512, %v945, 0
      %958 = vmatprep.subr.mxu0 0.0
      %959 = vmatpush1.msra.mxu0 %v416
      %960 = vmatprep.subr.mxu0 0.0
      %961 = vmatpush1.msra.mxu0 %v417
      %962 = vmatprep.subr.mxu0 0.0
      %963 = vmatpush1.msra.mxu0 0.0
      %964 = vmatprep.subr.mxu0 0.0
      %965 = vmatpush1.msra.mxu0 0.0
      %966 = vmatprep.subr.mxu0 0.0
      %967 = vmatpush1.msra.mxu0 0.0
      %968 = vmatprep.subr.mxu0 0.0
      %969 = vmatpush1.msra.mxu0 0.0
      %970 = vmatprep.subr.mxu0 0.0
      %971 = vmatpush1.msra.mxu0 0.0
      %972 = vmatprep.subr.mxu0 0.0
      %973 = vmatpush1.msra.mxu0 0.0
      %974 = vmatprep.subr.mxu0 0.0
      %975 = vmatpush1.msra.mxu0 0.0
      %976 = vmatprep.subr.mxu0 0.0
      %977 = vmatpush1.msra.mxu0 0.0
      %978 = vmatprep.subr.mxu0 0.0
      %979 = vmatpush1.msra.mxu0 0.0
      %980 = vmatprep.subr.mxu0 0.0
      %981 = vmatpush1.msra.mxu0 0.0
      %982 = vmatprep.subr.mxu0 0.0
      %983 = vmatpush1.msra.mxu0 0.0
      %984 = vmatprep.subr.mxu0 0.0
      %985 = vmatpush1.msra.mxu0 0.0
      %986 = vmatprep.subr.mxu0 0.0
      %987 = vmatpush1.msra.mxu0 0.0
      %988 = vmatprep.subr.mxu0 0.0
      %989 = vmatpush1.msra.mxu0 0.0
      %990 = vmatprep.subr.mxu0 0.0
      %991 = vmatpush1.msra.mxu0 0.0
      %992 = vmatprep.subr.mxu0 0.0
      %993 = vmatpush1.msra.mxu0 0.0
      %994 = vmatprep.subr.mxu0 0.0
      %995 = vmatpush1.msra.mxu0 0.0
      %996 = vmatprep.subr.mxu0 0.0
      %997 = vmatpush1.msra.mxu0 0.0
      %998 = vmatprep.subr.mxu0 0.0
      %999 = vmatpush1.msra.mxu0 0.0
      %1000 = vmatprep.subr.mxu0 0.0
      %1001 = vmatpush1.msra.mxu0 0.0
      %1002 = vmatprep.subr.mxu0 0.0
      %1003 = vmatpush1.msra.mxu0 0.0
      %1004 = vmatprep.subr.mxu0 0.0
      %1005 = vmatpush1.msra.mxu0 0.0
      %1006 = vmatprep.subr.mxu0 0.0
      %1007 = vmatpush1.msra.mxu0 0.0
      %1008 = vmatprep.subr.mxu0 0.0
      %1009 = vmatpush1.msra.mxu0 0.0
      %1010 = vmatprep.subr.mxu0 0.0
      %1011 = vmatpush1.msra.mxu0 0.0
      %1012 = vmatprep.subr.mxu0 0.0
      %1013 = vmatpush1.msra.mxu0 0.0
      %1014 = vmatprep.subr.mxu0 0.0
      %1015 = vmatpush1.msra.mxu0 0.0
      %1016 = vmatprep.subr.mxu0 0.0
      %1017 = vmatpush1.msra.mxu0 0.0
      %1018 = vmatprep.subr.mxu0 0.0
      %1019 = vmatpush1.msra.mxu0 0.0
      %1020 = vmatprep.subr.mxu0 0.0
      %1021 = vmatpush1.msra.mxu0 0.0
      %1022 = vmatprep.mubr.f32.mxu0 0.0
      %1023 = vmatmul.mubr.f32.gmra.mrb[0].mxu0 %v947
      %v1024 = vpop.f32.mrb[0].mxu0
      %v1025 = vadd.f32 0.0, %v1024
      %v1026 = vpop.f32.mrb[0].mxu0
      %1027 = vmatprep.mubr.f32.mxu0 0.0
      %1028 = vmatmul.mubr.f32.gmra.mrb[0].mxu0 %v950
      %v1029 = vpop.f32.mrb[0].mxu0
      %v1030 = vadd.f32 0.0, %v1029
      %v1031 = vpop.f32.mrb[0].mxu0
      %1032 = vmatprep.mubr.f32.mxu0 0.0
      %1033 = vmatmul.mubr.f32.gmra.mrb[0].mxu0 %v953
      %v1034 = vpop.f32.mrb[0].mxu0
      %v1035 = vadd.f32 0.0, %v1034
      %v1036 = vpop.f32.mrb[0].mxu0
      %1037 = vmatprep.mubr.f32.mxu0 0.0
      %1038 = vmatmul.mubr.f32.gmra.mrb[0].mxu0 %v956
      %v1039 = vpop.f32.mrb[0].mxu0
      %v1040 = vadd.f32 0.0, %v1039
      %v1041 = vpop.f32.mrb[0].mxu0
      %1042 = vdwg.mxu0
      %v1043 = vld [vmem:[%s1 + $0x98] sm:$0x1]
      %v1045 = vsel %vm717, %v1043, 0
      %1047 = vmatprep.subr.mxu0 %v922
      %1048 = vmatpush1.msra.mxu0 %v920
      %1049 = vmatprep.subr.mxu0 %v928
      %1050 = vmatpush1.msra.mxu0 %v926
      %1051 = vmatprep.subr.mxu0 %v934
      %1052 = vmatpush1.msra.mxu0 %v932
      %1053 = vmatprep.subr.mxu0 %v940
      %1054 = vmatpush1.msra.mxu0 %v938
      %1055 = vmatprep.subr.mxu0 0.0
      %1056 = vmatpush1.msra.mxu0 0.0
      %1057 = vmatprep.subr.mxu0 0.0
      %1058 = vmatpush1.msra.mxu0 0.0
      %1059 = vmatprep.subr.mxu0 0.0
      %1060 = vmatpush1.msra.mxu0 0.0
      %1061 = vmatprep.subr.mxu0 0.0
      %1062 = vmatpush1.msra.mxu0 0.0
      %1063 = vmatprep.subr.mxu0 0.0
      %1064 = vmatpush1.msra.mxu0 0.0
      %1065 = vmatprep.subr.mxu0 0.0
      %1066 = vmatpush1.msra.mxu0 0.0
      %1067 = vmatprep.subr.mxu0 0.0
      %1068 = vmatpush1.msra.mxu0 0.0
      %1069 = vmatprep.subr.mxu0 0.0
      %1070 = vmatpush1.msra.mxu0 0.0
      %1071 = vmatprep.subr.mxu0 0.0
      %1072 = vmatpush1.msra.mxu0 0.0
      %1073 = vmatprep.subr.mxu0 0.0
      %1074 = vmatpush1.msra.mxu0 0.0
      %1075 = vmatprep.subr.mxu0 0.0
      %1076 = vmatpush1.msra.mxu0 0.0
      %1077 = vmatprep.subr.mxu0 0.0
      %1078 = vmatpush1.msra.mxu0 0.0
      %1079 = vmatprep.subr.mxu0 0.0
      %1080 = vmatpush1.msra.mxu0 0.0
      %1081 = vmatprep.subr.mxu0 0.0
      %1082 = vmatpush1.msra.mxu0 0.0
      %1083 = vmatprep.subr.mxu0 0.0
      %1084 = vmatpush1.msra.mxu0 0.0
      %1085 = vmatprep.subr.mxu0 0.0
      %1086 = vmatpush1.msra.mxu0 0.0
      %1087 = vmatprep.subr.mxu0 0.0
      %1088 = vmatpush1.msra.mxu0 0.0
      %1089 = vmatprep.subr.mxu0 0.0
      %1090 = vmatpush1.msra.mxu0 0.0
      %1091 = vmatprep.subr.mxu0 0.0
      %1092 = vmatpush1.msra.mxu0 0.0
      %1093 = vmatprep.subr.mxu0 0.0
      %1094 = vmatpush1.msra.mxu0 0.0
      %1095 = vmatprep.subr.mxu0 0.0
      %1096 = vmatpush1.msra.mxu0 0.0
      %1097 = vmatprep.subr.mxu0 0.0
      %1098 = vmatpush1.msra.mxu0 0.0
      %1099 = vmatprep.subr.mxu0 0.0
      %1100 = vmatpush1.msra.mxu0 0.0
      %1101 = vmatprep.subr.mxu0 0.0
      %1102 = vmatpush1.msra.mxu0 0.0
      %1103 = vmatprep.subr.mxu0 0.0
      %1104 = vmatpush1.msra.mxu0 0.0
      %1105 = vmatprep.subr.mxu0 0.0
      %1106 = vmatpush1.msra.mxu0 0.0
      %1107 = vmatprep.subr.mxu0 0.0
      %1108 = vmatpush1.msra.mxu0 0.0
      %1109 = vmatprep.subr.mxu0 0.0
      %1110 = vmatpush1.msra.mxu0 0.0
      %1111 = vmatprep.mubr.f32.mxu0 0.0
      %1112 = vmatmul.mubr.f32.gmra.mrb[0].mxu0 %v1045
      %v1113 = vpop.f32.mrb[0].mxu0
      %v1114 = vadd.f32 0.0, %v1113
      %v1115 = vpop.f32.mrb[0].mxu0
      %v1116 = vadd.f32 0.0, %v1115
      %1117 = vdwg.mxu0
      %vm1118 = vcmask 1040384
      %v1119 = vsel %vm1118, %v1114, -inf
      %v1120 = vsel %vm1118, %v1116, -inf
      %v1121 = vmax.f32 %v1119, %v1120
      %1122 = vmax.xlane.f32.xlu0 %v1121
      %v1123 = vpop.xlane.xlu0 %1122
      %v1124 = vsub.f32 %v1114, %v1123
      %v1125 = vsub.f32 %v1116, %v1123
      %v1126 = vmul.f32 %v1124, 1.442695
      %v1127 = vpow.pop %v1126
      %v1128 = vmul.f32 %v1125, 1.442695
      %v1129 = vpow.pop %v1128
      %v1130 = vsel %vm1118, %v1127, 0.0
      %v1131 = vsel %vm1118, %v1129, 0.0
      %v1132 = vadd.f32 %v1130, %v1131
      %1133 = vadd.xlane.f32.xlu0 %v1132
      %v1134 = vpop.xlane.xlu0 %1133
      %v1135 = vrcp.pop %v1134
      %v1136 = vmul.f32 %v1127, %v1135
      %v1137 = vmul.f32 %v1129, %v1135
      %1138 = vmatprep.subr.mxu0 %v922
      %1139 = vmatpush1.xpose.msra.mxu0 %v920
      %1140 = vmatprep.subr.mxu0 %v928
      %1141 = vmatpush1.xpose.msra.mxu0 %v926
      %1142 = vmatprep.subr.mxu0 %v934
      %1143 = vmatpush1.xpose.msra.mxu0 %v932
      %1144 = vmatprep.subr.mxu0 %v940
      %1145 = vmatpush1.xpose.msra.mxu0 %v938
      %1146 = vmatprep.subr.mxu0 0.0
      %1147 = vmatpush1.xpose.msra.mxu0 0.0
      %1148 = vmatprep.subr.mxu0 0.0
      %1149 = vmatpush1.xpose.msra.mxu0 0.0
      %1150 = vmatprep.subr.mxu0 0.0
      %1151 = vmatpush1.xpose.msra.mxu0 0.0
      %1152 = vmatprep.subr.mxu0 0.0
      %1153 = vmatpush1.xpose.msra.mxu0 0.0
      %1154 = vmatprep.subr.mxu0 0.0
      %1155 = vmatpush1.xpose.msra.mxu0 0.0
      %1156 = vmatprep.subr.mxu0 0.0
      %1157 = vmatpush1.xpose.msra.mxu0 0.0
      %1158 = vmatprep.subr.mxu0 0.0
      %1159 = vmatpush1.xpose.msra.mxu0 0.0
      %1160 = vmatprep.subr.mxu0 0.0
      %1161 = vmatpush1.xpose.msra.mxu0 0.0
      %1162 = vmatprep.subr.mxu0 0.0
      %1163 = vmatpush1.xpose.msra.mxu0 0.0
      %1164 = vmatprep.subr.mxu0 0.0
      %1165 = vmatpush1.xpose.msra.mxu0 0.0
      %1166 = vmatprep.subr.mxu0 0.0
      %1167 = vmatpush1.xpose.msra.mxu0 0.0
      %1168 = vmatprep.subr.mxu0 0.0
      %1169 = vmatpush1.xpose.msra.mxu0 0.0
      %1170 = vmatprep.subr.mxu0 0.0
      %1171 = vmatpush1.xpose.msra.mxu0 0.0
      %1172 = vmatprep.subr.mxu0 0.0
      %1173 = vmatpush1.xpose.msra.mxu0 0.0
      %1174 = vmatprep.subr.mxu0 0.0
      %1175 = vmatpush1.xpose.msra.mxu0 0.0
      %1176 = vmatprep.subr.mxu0 0.0
      %1177 = vmatpush1.xpose.msra.mxu0 0.0
      %1178 = vmatprep.subr.mxu0 0.0
      %1179 = vmatpush1.xpose.msra.mxu0 0.0
      %1180 = vmatprep.subr.mxu0 0.0
      %1181 = vmatpush1.xpose.msra.mxu0 0.0
      %1182 = vmatprep.subr.mxu0 0.0
      %1183 = vmatpush1.xpose.msra.mxu0 0.0
      %1184 = vmatprep.subr.mxu0 0.0
      %1185 = vmatpush1.xpose.msra.mxu0 0.0
      %1186 = vmatprep.subr.mxu0 0.0
      %1187 = vmatpush1.xpose.msra.mxu0 0.0
      %1188 = vmatprep.subr.mxu0 0.0
      %1189 = vmatpush1.xpose.msra.mxu0 0.0
      %1190 = vmatprep.subr.mxu0 0.0
      %1191 = vmatpush1.xpose.msra.mxu0 0.0
      %1192 = vmatprep.subr.mxu0 0.0
      %1193 = vmatpush1.xpose.msra.mxu0 0.0
      %1194 = vmatprep.subr.mxu0 0.0
      %1195 = vmatpush1.xpose.msra.mxu0 0.0
      %1196 = vmatprep.subr.mxu0 0.0
      %1197 = vmatpush1.xpose.msra.mxu0 0.0
      %1198 = vmatprep.subr.mxu0 0.0
      %1199 = vmatpush1.xpose.msra.mxu0 0.0
      %1200 = vmatprep.subr.mxu0 0.0
      %1201 = vmatpush1.xpose.msra.mxu0 0.0
      %1202 = vmatprep.mubr.f32.mxu0 %v1137
      %1203 = vmatmul.mubr.f32.gmra.mrb[0].mxu0 %v1136
      %v1204 = vpop.f32.mrb[0].mxu0
      %v1205 = vadd.f32 0.0, %v1204
      %v1206 = vpop.f32.mrb[0].mxu0
      %1207 = vdwg.mxu0
      %1208 = vmatprep.subr.mxu0 0.0
      %1209 = vmatpush1.msra.mxu0 %v833
      %1210 = vmatprep.subr.mxu0 0.0
      %1211 = vmatpush1.msra.mxu0 %v834
      %1212 = vmatprep.subr.mxu0 0.0
      %1213 = vmatpush1.msra.mxu0 %v835
      %1214 = vmatprep.subr.mxu0 0.0
      %1215 = vmatpush1.msra.mxu0 %v836
      %1216 = vmatprep.subr.mxu0 0.0
      %1217 = vmatpush1.msra.mxu0 0.0
      %1218 = vmatprep.subr.mxu0 0.0
      %1219 = vmatpush1.msra.mxu0 0.0
      %1220 = vmatprep.subr.mxu0 0.0
      %1221 = vmatpush1.msra.mxu0 0.0
      %1222 = vmatprep.subr.mxu0 0.0
      %1223 = vmatpush1.msra.mxu0 0.0
      %1224 = vmatprep.subr.mxu0 0.0
      %1225 = vmatpush1.msra.mxu0 0.0
      %1226 = vmatprep.subr.mxu0 0.0
      %1227 = vmatpush1.msra.mxu0 0.0
      %1228 = vmatprep.subr.mxu0 0.0
      %1229 = vmatpush1.msra.mxu0 0.0
      %1230 = vmatprep.subr.mxu0 0.0
      %1231 = vmatpush1.msra.mxu0 0.0
      %1232 = vmatprep.subr.mxu0 0.0
      %1233 = vmatpush1.msra.mxu0 0.0
      %1234 = vmatprep.subr.mxu0 0.0
      %1235 = vmatpush1.msra.mxu0 0.0
      %1236 = vmatprep.subr.mxu0 0.0
      %1237 = vmatpush1.msra.mxu0 0.0
      %1238 = vmatprep.subr.mxu0 0.0
      %1239 = vmatpush1.msra.mxu0 0.0
      %1240 = vmatprep.subr.mxu0 0.0
      %1241 = vmatpush1.msra.mxu0 0.0
      %1242 = vmatprep.subr.mxu0 0.0
      %1243 = vmatpush1.msra.mxu0 0.0
      %1244 = vmatprep.subr.mxu0 0.0
      %1245 = vmatpush1.msra.mxu0 0.0
      %1246 = vmatprep.subr.mxu0 0.0
      %1247 = vmatpush1.msra.mxu0 0.0
      %1248 = vmatprep.subr.mxu0 0.0
      %1249 = vmatpush1.msra.mxu0 0.0
      %1250 = vmatprep.subr.mxu0 0.0
      %1251 = vmatpush1.msra.mxu0 0.0
      %1252 = vmatprep.subr.mxu0 0.0
      %1253 = vmatpush1.msra.mxu0 0.0
      %1254 = vmatprep.subr.mxu0 0.0
      %1255 = vmatpush1.msra.mxu0 0.0
      %1256 = vmatprep.subr.mxu0 0.0
      %1257 = vmatpush1.msra.mxu0 0.0
      %1258 = vmatprep.subr.mxu0 0.0
      %1259 = vmatpush1.msra.mxu0 0.0
      %1260 = vmatprep.subr.mxu0 0.0
      %1261 = vmatpush1.msra.mxu0 0.0
      %1262 = vmatprep.subr.mxu0 0.0
      %1263 = vmatpush1.msra.mxu0 0.0
      %1264 = vmatprep.subr.mxu0 0.0
      %1265 = vmatpush1.msra.mxu0 0.0
      %1266 = vmatprep.subr.mxu0 0.0
      %1267 = vmatpush1.msra.mxu0 0.0
      %1268 = vmatprep.subr.mxu0 0.0
      %1269 = vmatpush1.msra.mxu0 0.0
      %1270 = vmatprep.subr.mxu0 0.0
      %1271 = vmatpush1.msra.mxu0 0.0
      %1272 = vmatprep.mubr.f32.mxu0 0.0
      %1273 = vmatmul.mubr.f32.gmra.mrb[0].mxu0 %v1045
      %v1274 = vpop.f32.mrb[0].mxu0
      %v1275 = vadd.f32 0.0, %v1274
      %v1276 = vpop.f32.mrb[0].mxu0
      %1277 = vdwg.mxu0
      %1279 = vset.pattern.permute.xlu0 0
      %1280 = vperm.xlu0 %1279, %v1275
      %v1281 = vpop.permute.xlu0 %1280
      %v1283 = vadd.f32 %v1114, %v1281
      %v1284 = vadd.f32 %v1116, %v1281
      %v1285 = vld [vmem:[%s1 + $0x99] sm:$0x1]
      %v1287 = vsel %vm717, %v1285, 0
      %1289 = vmatprep.subr.mxu0 0.0
      %1290 = vmatpush1.msra.mxu0 %v1025
      %1291 = vmatprep.subr.mxu0 0.0
      %1292 = vmatpush1.msra.mxu0 %v1030
      %1293 = vmatprep.subr.mxu0 0.0
      %1294 = vmatpush1.msra.mxu0 %v1035
      %1295 = vmatprep.subr.mxu0 0.0
      %1296 = vmatpush1.msra.mxu0 %v1040
      %1297 = vmatprep.subr.mxu0 0.0
      %1298 = vmatpush1.msra.mxu0 0.0
      %1299 = vmatprep.subr.mxu0 0.0
      %1300 = vmatpush1.msra.mxu0 0.0
      %1301 = vmatprep.subr.mxu0 0.0
      %1302 = vmatpush1.msra.mxu0 0.0
      %1303 = vmatprep.subr.mxu0 0.0
      %1304 = vmatpush1.msra.mxu0 0.0
      %1305 = vmatprep.subr.mxu0 0.0
      %1306 = vmatpush1.msra.mxu0 0.0
      %1307 = vmatprep.subr.mxu0 0.0
      %1308 = vmatpush1.msra.mxu0 0.0
      %1309 = vmatprep.subr.mxu0 0.0
      %1310 = vmatpush1.msra.mxu0 0.0
      %1311 = vmatprep.subr.mxu0 0.0
      %1312 = vmatpush1.msra.mxu0 0.0
      %1313 = vmatprep.subr.mxu0 0.0
      %1314 = vmatpush1.msra.mxu0 0.0
      %1315 = vmatprep.subr.mxu0 0.0
      %1316 = vmatpush1.msra.mxu0 0.0
      %1317 = vmatprep.subr.mxu0 0.0
      %1318 = vmatpush1.msra.mxu0 0.0
      %1319 = vmatprep.subr.mxu0 0.0
      %1320 = vmatpush1.msra.mxu0 0.0
      %1321 = vmatprep.subr.mxu0 0.0
      %1322 = vmatpush1.msra.mxu0 0.0
      %1323 = vmatprep.subr.mxu0 0.0
      %1324 = vmatpush1.msra.mxu0 0.0
      %1325 = vmatprep.subr.mxu0 0.0
      %1326 = vmatpush1.msra.mxu0 0.0
      %1327 = vmatprep.subr.mxu0 0.0
      %1328 = vmatpush1.msra.mxu0 0.0
      %1329 = vmatprep.subr.mxu0 0.0
      %1330 = vmatpush1.msra.mxu0 0.0
      %1331 = vmatprep.subr.mxu0 0.0
      %1332 = vmatpush1.msra.mxu0 0.0
      %1333 = vmatprep.subr.mxu0 0.0
      %1334 = vmatpush1.msra.mxu0 0.0
      %1335 = vmatprep.subr.mxu0 0.0
      %1336 = vmatpush1.msra.mxu0 0.0
      %1337 = vmatprep.subr.mxu0 0.0
      %1338 = vmatpush1.msra.mxu0 0.0
      %1339 = vmatprep.subr.mxu0 0.0
      %1340 = vmatpush1.msra.mxu0 0.0
      %1341 = vmatprep.subr.mxu0 0.0
      %1342 = vmatpush1.msra.mxu0 0.0
      %1343 = vmatprep.subr.mxu0 0.0
      %1344 = vmatpush1.msra.mxu0 0.0
      %1345 = vmatprep.subr.mxu0 0.0
      %1346 = vmatpush1.msra.mxu0 0.0
      %1347 = vmatprep.subr.mxu0 0.0
      %1348 = vmatpush1.msra.mxu0 0.0
      %1349 = vmatprep.subr.mxu0 0.0
      %1350 = vmatpush1.msra.mxu0 0.0
      %1351 = vmatprep.subr.mxu0 0.0
      %1352 = vmatpush1.msra.mxu0 0.0
      %1353 = vmatprep.mubr.f32.mxu0 0.0
      %1354 = vmatmul.mubr.f32.gmra.mrb[0].mxu0 %v1287
      %v1355 = vpop.f32.mrb[0].mxu0
      %v1356 = vadd.f32 0.0, %v1355
      %v1357 = vpop.f32.mrb[0].mxu0
      %1358 = vdwg.mxu0
      %vm1359 = vcmask 516096
      %v1360 = vsel %vm1359, %v1356, -inf
      %1361 = vmax.xlane.f32.xlu0 %v1360
      %v1362 = vpop.xlane.xlu0 %1361
      %v1363 = vsub.f32 %v1356, %v1362
      %v1364 = vmul.f32 %v1363, 1.442695
      %v1365 = vpow.pop %v1364
      %v1366 = vsel %vm1359, %v1365, 0.0
      %1367 = vadd.xlane.f32.xlu0 %v1366
      %v1368 = vpop.xlane.xlu0 %1367
      %v1369 = vrcp.pop %v1368
      %v1370 = vmul.f32 %v1365, %v1369
      %v1372 = vsel %vm430, %v1370, 0
      %v1375 = vsel %vm430, %v1025, 0
      %v1378 = vsel %vm430, %v1030, 0
      %v1381 = vsel %vm430, %v1035, 0
      %v1384 = vsel %vm430, %v1040, 0
      %1386 = vmatprep.subr.mxu0 0.0
      %1387 = vmatpush1.xpose.msra.mxu0 %v1375
      %1388 = vmatprep.subr.mxu0 0.0
      %1389 = vmatpush1.xpose.msra.mxu0 %v1378
      %1390 = vmatprep.subr.mxu0 0.0
      %1391 = vmatpush1.xpose.msra.mxu0 %v1381
      %1392 = vmatprep.subr.mxu0 0.0
      %1393 = vmatpush1.xpose.msra.mxu0 %v1384
      %1394 = vmatprep.subr.mxu0 0.0
      %1395 = vmatpush1.xpose.msra.mxu0 0.0
      %1396 = vmatprep.subr.mxu0 0.0
      %1397 = vmatpush1.xpose.msra.mxu0 0.0
      %1398 = vmatprep.subr.mxu0 0.0
      %1399 = vmatpush1.xpose.msra.mxu0 0.0
      %1400 = vmatprep.subr.mxu0 0.0
      %1401 = vmatpush1.xpose.msra.mxu0 0.0
      %1402 = vmatprep.subr.mxu0 0.0
      %1403 = vmatpush1.xpose.msra.mxu0 0.0
      %1404 = vmatprep.subr.mxu0 0.0
      %1405 = vmatpush1.xpose.msra.mxu0 0.0
      %1406 = vmatprep.subr.mxu0 0.0
      %1407 = vmatpush1.xpose.msra.mxu0 0.0
      %1408 = vmatprep.subr.mxu0 0.0
      %1409 = vmatpush1.xpose.msra.mxu0 0.0
      %1410 = vmatprep.subr.mxu0 0.0
      %1411 = vmatpush1.xpose.msra.mxu0 0.0
      %1412 = vmatprep.subr.mxu0 0.0
      %1413 = vmatpush1.xpose.msra.mxu0 0.0
      %1414 = vmatprep.subr.mxu0 0.0
      %1415 = vmatpush1.xpose.msra.mxu0 0.0
      %1416 = vmatprep.subr.mxu0 0.0
      %1417 = vmatpush1.xpose.msra.mxu0 0.0
      %1418 = vmatprep.subr.mxu0 0.0
      %1419 = vmatpush1.xpose.msra.mxu0 0.0
      %1420 = vmatprep.subr.mxu0 0.0
      %1421 = vmatpush1.xpose.msra.mxu0 0.0
      %1422 = vmatprep.subr.mxu0 0.0
      %1423 = vmatpush1.xpose.msra.mxu0 0.0
      %1424 = vmatprep.subr.mxu0 0.0
      %1425 = vmatpush1.xpose.msra.mxu0 0.0
      %1426 = vmatprep.subr.mxu0 0.0
      %1427 = vmatpush1.xpose.msra.mxu0 0.0
      %1428 = vmatprep.subr.mxu0 0.0
      %1429 = vmatpush1.xpose.msra.mxu0 0.0
      %1430 = vmatprep.subr.mxu0 0.0
      %1431 = vmatpush1.xpose.msra.mxu0 0.0
      %1432 = vmatprep.subr.mxu0 0.0
      %1433 = vmatpush1.xpose.msra.mxu0 0.0
      %1434 = vmatprep.subr.mxu0 0.0
      %1435 = vmatpush1.xpose.msra.mxu0 0.0
      %1436 = vmatprep.subr.mxu0 0.0
      %1437 = vmatpush1.xpose.msra.mxu0 0.0
      %1438 = vmatprep.subr.mxu0 0.0
      %1439 = vmatpush1.xpose.msra.mxu0 0.0
      %1440 = vmatprep.subr.mxu0 0.0
      %1441 = vmatpush1.xpose.msra.mxu0 0.0
      %1442 = vmatprep.subr.mxu0 0.0
      %1443 = vmatpush1.xpose.msra.mxu0 0.0
      %1444 = vmatprep.subr.mxu0 0.0
      %1445 = vmatpush1.xpose.msra.mxu0 0.0
      %1446 = vmatprep.subr.mxu0 0.0
      %1447 = vmatpush1.xpose.msra.mxu0 0.0
      %1448 = vmatprep.subr.mxu0 0.0
      %1449 = vmatpush1.xpose.msra.mxu0 0.0
      %1450 = vmatprep.mubr.f32.mxu0 0.0
      %1451 = vmatmul.mubr.f32.gmra.mrb[0].mxu0 %v1372
      %v1452 = vpop.f32.mrb[0].mxu0
      %v1453 = vadd.f32 0.0, %v1452
      %v1454 = vpop.f32.mrb[0].mxu0
      %1455 = vdwg.mxu0
      %1456 = vmatprep.subr.mxu0 0.0
      %1457 = vmatpush1.msra.mxu0 %v833
      %1458 = vmatprep.subr.mxu0 0.0
      %1459 = vmatpush1.msra.mxu0 %v834
      %1460 = vmatprep.subr.mxu0 0.0
      %1461 = vmatpush1.msra.mxu0 %v835
      %1462 = vmatprep.subr.mxu0 0.0
      %1463 = vmatpush1.msra.mxu0 %v836
      %1464 = vmatprep.subr.mxu0 0.0
      %1465 = vmatpush1.msra.mxu0 0.0
      %1466 = vmatprep.subr.mxu0 0.0
      %1467 = vmatpush1.msra.mxu0 0.0
      %1468 = vmatprep.subr.mxu0 0.0
      %1469 = vmatpush1.msra.mxu0 0.0
      %1470 = vmatprep.subr.mxu0 0.0
      %1471 = vmatpush1.msra.mxu0 0.0
      %1472 = vmatprep.subr.mxu0 0.0
      %1473 = vmatpush1.msra.mxu0 0.0
      %1474 = vmatprep.subr.mxu0 0.0
      %1475 = vmatpush1.msra.mxu0 0.0
      %1476 = vmatprep.subr.mxu0 0.0
      %1477 = vmatpush1.msra.mxu0 0.0
      %1478 = vmatprep.subr.mxu0 0.0
      %1479 = vmatpush1.msra.mxu0 0.0
      %1480 = vmatprep.subr.mxu0 0.0
      %1481 = vmatpush1.msra.mxu0 0.0
      %1482 = vmatprep.subr.mxu0 0.0
      %1483 = vmatpush1.msra.mxu0 0.0
      %1484 = vmatprep.subr.mxu0 0.0
      %1485 = vmatpush1.msra.mxu0 0.0
      %1486 = vmatprep.subr.mxu0 0.0
      %1487 = vmatpush1.msra.mxu0 0.0
      %1488 = vmatprep.subr.mxu0 0.0
      %1489 = vmatpush1.msra.mxu0 0.0
      %1490 = vmatprep.subr.mxu0 0.0
      %1491 = vmatpush1.msra.mxu0 0.0
      %1492 = vmatprep.subr.mxu0 0.0
      %1493 = vmatpush1.msra.mxu0 0.0
      %1494 = vmatprep.subr.mxu0 0.0
      %1495 = vmatpush1.msra.mxu0 0.0
      %1496 = vmatprep.subr.mxu0 0.0
      %1497 = vmatpush1.msra.mxu0 0.0
      %1498 = vmatprep.subr.mxu0 0.0
      %1499 = vmatpush1.msra.mxu0 0.0
      %1500 = vmatprep.subr.mxu0 0.0
      %1501 = vmatpush1.msra.mxu0 0.0
      %1502 = vmatprep.subr.mxu0 0.0
      %1503 = vmatpush1.msra.mxu0 0.0
      %1504 = vmatprep.subr.mxu0 0.0
      %1505 = vmatpush1.msra.mxu0 0.0
      %1506 = vmatprep.subr.mxu0 0.0
      %1507 = vmatpush1.msra.mxu0 0.0
      %1508 = vmatprep.subr.mxu0 0.0
      %1509 = vmatpush1.msra.mxu0 0.0
      %1510 = vmatprep.subr.mxu0 0.0
      %1511 = vmatpush1.msra.mxu0 0.0
      %1512 = vmatprep.subr.mxu0 0.0
      %1513 = vmatpush1.msra.mxu0 0.0
      %1514 = vmatprep.subr.mxu0 0.0
      %1515 = vmatpush1.msra.mxu0 0.0
      %1516 = vmatprep.subr.mxu0 0.0
      %1517 = vmatpush1.msra.mxu0 0.0
      %1518 = vmatprep.subr.mxu0 0.0
      %1519 = vmatpush1.msra.mxu0 0.0
      %1520 = vmatprep.mubr.f32.mxu0 0.0
      %1521 = vmatmul.mubr.f32.gmra.mrb[0].mxu0 %v1287
      %v1522 = vpop.f32.mrb[0].mxu0
      %v1523 = vadd.f32 0.0, %v1522
      %v1524 = vpop.f32.mrb[0].mxu0
      %1525 = vdwg.mxu0
      %1527 = vset.pattern.permute.xlu0 0
      %1528 = vperm.xlu0 %1527, %v1523
      %v1529 = vpop.permute.xlu0 %1528
      %v1531 = vadd.f32 %v1356, %v1529
      %v1532 = vld [vmem:[%s1 + $0x9a] sm:$0x1]
      %v1534 = vsel %vm717, %v1532, 0
      %1536 = vmatprep.subr.mxu0 0.0
      %1537 = vmatpush1.msra.mxu0 %v610
      %1538 = vmatprep.subr.mxu0 0.0
      %1539 = vmatpush1.msra.mxu0 %v611
      %1540 = vmatprep.subr.mxu0 0.0
      %1541 = vmatpush1.msra.mxu0 %v612
      %1542 = vmatprep.subr.mxu0 0.0
      %1543 = vmatpush1.msra.mxu0 %v613
      %1544 = vmatprep.subr.mxu0 0.0
      %1545 = vmatpush1.msra.mxu0 0.0
      %1546 = vmatprep.subr.mxu0 0.0
      %1547 = vmatpush1.msra.mxu0 0.0
      %1548 = vmatprep.subr.mxu0 0.0
      %1549 = vmatpush1.msra.mxu0 0.0
      %1550 = vmatprep.subr.mxu0 0.0
      %1551 = vmatpush1.msra.mxu0 0.0
      %1552 = vmatprep.subr.mxu0 0.0
      %1553 = vmatpush1.msra.mxu0 0.0
      %1554 = vmatprep.subr.mxu0 0.0
      %1555 = vmatpush1.msra.mxu0 0.0
      %1556 = vmatprep.subr.mxu0 0.0
      %1557 = vmatpush1.msra.mxu0 0.0
      %1558 = vmatprep.subr.mxu0 0.0
      %1559 = vmatpush1.msra.mxu0 0.0
      %1560 = vmatprep.subr.mxu0 0.0
      %1561 = vmatpush1.msra.mxu0 0.0
      %1562 = vmatprep.subr.mxu0 0.0
      %1563 = vmatpush1.msra.mxu0 0.0
      %1564 = vmatprep.subr.mxu0 0.0
      %1565 = vmatpush1.msra.mxu0 0.0
      %1566 = vmatprep.subr.mxu0 0.0
      %1567 = vmatpush1.msra.mxu0 0.0
      %1568 = vmatprep.subr.mxu0 0.0
      %1569 = vmatpush1.msra.mxu0 0.0
      %1570 = vmatprep.subr.mxu0 0.0
      %1571 = vmatpush1.msra.mxu0 0.0
      %1572 = vmatprep.subr.mxu0 0.0
      %1573 = vmatpush1.msra.mxu0 0.0
      %1574 = vmatprep.subr.mxu0 0.0
      %1575 = vmatpush1.msra.mxu0 0.0
      %1576 = vmatprep.subr.mxu0 0.0
      %1577 = vmatpush1.msra.mxu0 0.0
      %1578 = vmatprep.subr.mxu0 0.0
      %1579 = vmatpush1.msra.mxu0 0.0
      %1580 = vmatprep.subr.mxu0 0.0
      %1581 = vmatpush1.msra.mxu0 0.0
      %1582 = vmatprep.subr.mxu0 0.0
      %1583 = vmatpush1.msra.mxu0 0.0
      %1584 = vmatprep.subr.mxu0 0.0
      %1585 = vmatpush1.msra.mxu0 0.0
      %1586 = vmatprep.subr.mxu0 0.0
      %1587 = vmatpush1.msra.mxu0 0.0
      %1588 = vmatprep.subr.mxu0 0.0
      %1589 = vmatpush1.msra.mxu0 0.0
      %1590 = vmatprep.subr.mxu0 0.0
      %1591 = vmatpush1.msra.mxu0 0.0
      %1592 = vmatprep.subr.mxu0 0.0
      %1593 = vmatpush1.msra.mxu0 0.0
      %1594 = vmatprep.subr.mxu0 0.0
      %1595 = vmatpush1.msra.mxu0 0.0
      %1596 = vmatprep.subr.mxu0 0.0
      %1597 = vmatpush1.msra.mxu0 0.0
      %1598 = vmatprep.subr.mxu0 0.0
      %1599 = vmatpush1.msra.mxu0 0.0
      %1600 = vmatprep.mubr.f32.mxu0 0.0
      %1601 = vmatmul.mubr.f32.gmra.mrb[0].mxu0 %v1534
      %v1602 = vpop.f32.mrb[0].mxu0
      %v1603 = vadd.f32 0.0, %v1602
      %v1604 = vpop.f32.mrb[0].mxu0
      %1605 = vdwg.mxu0
      %vm1606 = vcmask 122880
      %v1607 = vsel %vm1606, %v1603, -inf
      %1608 = vmax.xlane.f32.xlu0 %v1607
      %v1609 = vpop.xlane.xlu0 %1608
      %v1610 = vsub.f32 %v1603, %v1609
      %v1611 = vmul.f32 %v1610, 1.442695
      %v1612 = vpow.pop %v1611
      %v1613 = vsel %vm1606, %v1612, 0.0
      %1614 = vadd.xlane.f32.xlu0 %v1613
      %v1615 = vpop.xlane.xlu0 %1614
      %v1616 = vrcp.pop %v1615
      %v1617 = vmul.f32 %v1612, %v1616
      %v1619 = vsel %vm512, %v1617, 0
      %1621 = vmatprep.subr.mxu0 0.0
      %1622 = vmatpush1.xpose.msra.mxu0 %v621
      %1623 = vmatprep.subr.mxu0 0.0
      %1624 = vmatpush1.xpose.msra.mxu0 %v624
      %1625 = vmatprep.subr.mxu0 0.0
      %1626 = vmatpush1.xpose.msra.mxu0 %v627
      %1627 = vmatprep.subr.mxu0 0.0
      %1628 = vmatpush1.xpose.msra.mxu0 %v630
      %1629 = vmatprep.subr.mxu0 0.0
      %1630 = vmatpush1.xpose.msra.mxu0 0.0
      %1631 = vmatprep.subr.mxu0 0.0
      %1632 = vmatpush1.xpose.msra.mxu0 0.0
      %1633 = vmatprep.subr.mxu0 0.0
      %1634 = vmatpush1.xpose.msra.mxu0 0.0
      %1635 = vmatprep.subr.mxu0 0.0
      %1636 = vmatpush1.xpose.msra.mxu0 0.0
      %1637 = vmatprep.subr.mxu0 0.0
      %1638 = vmatpush1.xpose.msra.mxu0 0.0
      %1639 = vmatprep.subr.mxu0 0.0
      %1640 = vmatpush1.xpose.msra.mxu0 0.0
      %1641 = vmatprep.subr.mxu0 0.0
      %1642 = vmatpush1.xpose.msra.mxu0 0.0
      %1643 = vmatprep.subr.mxu0 0.0
      %1644 = vmatpush1.xpose.msra.mxu0 0.0
      %1645 = vmatprep.subr.mxu0 0.0
      %1646 = vmatpush1.xpose.msra.mxu0 0.0
      %1647 = vmatprep.subr.mxu0 0.0
      %1648 = vmatpush1.xpose.msra.mxu0 0.0
      %1649 = vmatprep.subr.mxu0 0.0
      %1650 = vmatpush1.xpose.msra.mxu0 0.0
      %1651 = vmatprep.subr.mxu0 0.0
      %1652 = vmatpush1.xpose.msra.mxu0 0.0
      %1653 = vmatprep.subr.mxu0 0.0
      %1654 = vmatpush1.xpose.msra.mxu0 0.0
      %1655 = vmatprep.subr.mxu0 0.0
      %1656 = vmatpush1.xpose.msra.mxu0 0.0
      %1657 = vmatprep.subr.mxu0 0.0
      %1658 = vmatpush1.xpose.msra.mxu0 0.0
      %1659 = vmatprep.subr.mxu0 0.0
      %1660 = vmatpush1.xpose.msra.mxu0 0.0
      %1661 = vmatprep.subr.mxu0 0.0
      %1662 = vmatpush1.xpose.msra.mxu0 0.0
      %1663 = vmatprep.subr.mxu0 0.0
      %1664 = vmatpush1.xpose.msra.mxu0 0.0
      %1665 = vmatprep.subr.mxu0 0.0
      %1666 = vmatpush1.xpose.msra.mxu0 0.0
      %1667 = vmatprep.subr.mxu0 0.0
      %1668 = vmatpush1.xpose.msra.mxu0 0.0
      %1669 = vmatprep.subr.mxu0 0.0
      %1670 = vmatpush1.xpose.msra.mxu0 0.0
      %1671 = vmatprep.subr.mxu0 0.0
      %1672 = vmatpush1.xpose.msra.mxu0 0.0
      %1673 = vmatprep.subr.mxu0 0.0
      %1674 = vmatpush1.xpose.msra.mxu0 0.0
      %1675 = vmatprep.subr.mxu0 0.0
      %1676 = vmatpush1.xpose.msra.mxu0 0.0
      %1677 = vmatprep.subr.mxu0 0.0
      %1678 = vmatpush1.xpose.msra.mxu0 0.0
      %1679 = vmatprep.subr.mxu0 0.0
      %1680 = vmatpush1.xpose.msra.mxu0 0.0
      %1681 = vmatprep.subr.mxu0 0.0
      %1682 = vmatpush1.xpose.msra.mxu0 0.0
      %1683 = vmatprep.subr.mxu0 0.0
      %1684 = vmatpush1.xpose.msra.mxu0 0.0
      %1685 = vmatprep.mubr.f32.mxu0 0.0
      %1686 = vmatmul.mubr.f32.gmra.mrb[0].mxu0 %v1619
      %v1687 = vpop.f32.mrb[0].mxu0
      %v1688 = vadd.f32 0.0, %v1687
      %v1689 = vpop.f32.mrb[0].mxu0
      %1690 = vdwg.mxu0
      %1691 = vmatprep.subr.mxu0 0.0
      %1692 = vmatpush1.msra.mxu0 %v833
      %1693 = vmatprep.subr.mxu0 0.0
      %1694 = vmatpush1.msra.mxu0 %v834
      %1695 = vmatprep.subr.mxu0 0.0
      %1696 = vmatpush1.msra.mxu0 %v835
      %1697 = vmatprep.subr.mxu0 0.0
      %1698 = vmatpush1.msra.mxu0 %v836
      %1699 = vmatprep.subr.mxu0 0.0
      %1700 = vmatpush1.msra.mxu0 0.0
      %1701 = vmatprep.subr.mxu0 0.0
      %1702 = vmatpush1.msra.mxu0 0.0
      %1703 = vmatprep.subr.mxu0 0.0
      %1704 = vmatpush1.msra.mxu0 0.0
      %1705 = vmatprep.subr.mxu0 0.0
      %1706 = vmatpush1.msra.mxu0 0.0
      %1707 = vmatprep.subr.mxu0 0.0
      %1708 = vmatpush1.msra.mxu0 0.0
      %1709 = vmatprep.subr.mxu0 0.0
      %1710 = vmatpush1.msra.mxu0 0.0
      %1711 = vmatprep.subr.mxu0 0.0
      %1712 = vmatpush1.msra.mxu0 0.0
      %1713 = vmatprep.subr.mxu0 0.0
      %1714 = vmatpush1.msra.mxu0 0.0
      %1715 = vmatprep.subr.mxu0 0.0
      %1716 = vmatpush1.msra.mxu0 0.0
      %1717 = vmatprep.subr.mxu0 0.0
      %1718 = vmatpush1.msra.mxu0 0.0
      %1719 = vmatprep.subr.mxu0 0.0
      %1720 = vmatpush1.msra.mxu0 0.0
      %1721 = vmatprep.subr.mxu0 0.0
      %1722 = vmatpush1.msra.mxu0 0.0
      %1723 = vmatprep.subr.mxu0 0.0
      %1724 = vmatpush1.msra.mxu0 0.0
      %1725 = vmatprep.subr.mxu0 0.0
      %1726 = vmatpush1.msra.mxu0 0.0
      %1727 = vmatprep.subr.mxu0 0.0
      %1728 = vmatpush1.msra.mxu0 0.0
      %1729 = vmatprep.subr.mxu0 0.0
      %1730 = vmatpush1.msra.mxu0 0.0
      %1731 = vmatprep.subr.mxu0 0.0
      %1732 = vmatpush1.msra.mxu0 0.0
      %1733 = vmatprep.subr.mxu0 0.0
      %1734 = vmatpush1.msra.mxu0 0.0
      %1735 = vmatprep.subr.mxu0 0.0
      %1736 = vmatpush1.msra.mxu0 0.0
      %1737 = vmatprep.subr.mxu0 0.0
      %1738 = vmatpush1.msra.mxu0 0.0
      %1739 = vmatprep.subr.mxu0 0.0
      %1740 = vmatpush1.msra.mxu0 0.0
      %1741 = vmatprep.subr.mxu0 0.0
      %1742 = vmatpush1.msra.mxu0 0.0
      %1743 = vmatprep.subr.mxu0 0.0
      %1744 = vmatpush1.msra.mxu0 0.0
      %1745 = vmatprep.subr.mxu0 0.0
      %1746 = vmatpush1.msra.mxu0 0.0
      %1747 = vmatprep.subr.mxu0 0.0
      %1748 = vmatpush1.msra.mxu0 0.0
      %1749 = vmatprep.subr.mxu0 0.0
      %1750 = vmatpush1.msra.mxu0 0.0
      %1751 = vmatprep.subr.mxu0 0.0
      %1752 = vmatpush1.msra.mxu0 0.0
      %1753 = vmatprep.subr.mxu0 0.0
      %1754 = vmatpush1.msra.mxu0 0.0
      %1755 = vmatprep.mubr.f32.mxu0 0.0
      %1756 = vmatmul.mubr.f32.gmra.mrb[0].mxu0 %v1534
      %v1757 = vpop.f32.mrb[0].mxu0
      %v1758 = vadd.f32 0.0, %v1757
      %v1759 = vpop.f32.mrb[0].mxu0
      %1760 = vdwg.mxu0
      %1762 = vset.pattern.permute.xlu0 0
      %1763 = vperm.xlu0 %1762, %v1758
      %v1764 = vpop.permute.xlu0 %1763
      %v1766 = vadd.f32 %v1603, %v1764
      %v1767 = vld [vmem:[%s1 + $0x9b] sm:$0x1]
      %v1769 = vsel %vm717, %v1767, 0
      %1771 = vmatprep.subr.mxu0 0.0
      %1772 = vmatpush1.msra.mxu0 %v815
      %1773 = vmatprep.subr.mxu0 0.0
      %1774 = vmatpush1.msra.mxu0 %v816
      %1775 = vmatprep.subr.mxu0 0.0
      %1776 = vmatpush1.msra.mxu0 %v817
      %1777 = vmatprep.subr.mxu0 0.0
      %1778 = vmatpush1.msra.mxu0 %v818
      %1779 = vmatprep.subr.mxu0 0.0
      %1780 = vmatpush1.msra.mxu0 0.0
      %1781 = vmatprep.subr.mxu0 0.0
      %1782 = vmatpush1.msra.mxu0 0.0
      %1783 = vmatprep.subr.mxu0 0.0
      %1784 = vmatpush1.msra.mxu0 0.0
      %1785 = vmatprep.subr.mxu0 0.0
      %1786 = vmatpush1.msra.mxu0 0.0
      %1787 = vmatprep.subr.mxu0 0.0
      %1788 = vmatpush1.msra.mxu0 0.0
      %1789 = vmatprep.subr.mxu0 0.0
      %1790 = vmatpush1.msra.mxu0 0.0
      %1791 = vmatprep.subr.mxu0 0.0
      %1792 = vmatpush1.msra.mxu0 0.0
      %1793 = vmatprep.subr.mxu0 0.0
      %1794 = vmatpush1.msra.mxu0 0.0
      %1795 = vmatprep.subr.mxu0 0.0
      %1796 = vmatpush1.msra.mxu0 0.0
      %1797 = vmatprep.subr.mxu0 0.0
      %1798 = vmatpush1.msra.mxu0 0.0
      %1799 = vmatprep.subr.mxu0 0.0
      %1800 = vmatpush1.msra.mxu0 0.0
      %1801 = vmatprep.subr.mxu0 0.0
      %1802 = vmatpush1.msra.mxu0 0.0
      %1803 = vmatprep.subr.mxu0 0.0
      %1804 = vmatpush1.msra.mxu0 0.0
      %1805 = vmatprep.subr.mxu0 0.0
      %1806 = vmatpush1.msra.mxu0 0.0
      %1807 = vmatprep.subr.mxu0 0.0
      %1808 = vmatpush1.msra.mxu0 0.0
      %1809 = vmatprep.subr.mxu0 0.0
      %1810 = vmatpush1.msra.mxu0 0.0
      %1811 = vmatprep.subr.mxu0 0.0
      %1812 = vmatpush1.msra.mxu0 0.0
      %1813 = vmatprep.subr.mxu0 0.0
      %1814 = vmatpush1.msra.mxu0 0.0
      %1815 = vmatprep.subr.mxu0 0.0
      %1816 = vmatpush1.msra.mxu0 0.0
      %1817 = vmatprep.subr.mxu0 0.0
      %1818 = vmatpush1.msra.mxu0 0.0
      %1819 = vmatprep.subr.mxu0 0.0
      %1820 = vmatpush1.msra.mxu0 0.0
      %1821 = vmatprep.subr.mxu0 0.0
      %1822 = vmatpush1.msra.mxu0 0.0
      %1823 = vmatprep.subr.mxu0 0.0
      %1824 = vmatpush1.msra.mxu0 0.0
      %1825 = vmatprep.subr.mxu0 0.0
      %1826 = vmatpush1.msra.mxu0 0.0
      %1827 = vmatprep.subr.mxu0 0.0
      %1828 = vmatpush1.msra.mxu0 0.0
      %1829 = vmatprep.subr.mxu0 0.0
      %1830 = vmatpush1.msra.mxu0 0.0
      %1831 = vmatprep.subr.mxu0 0.0
      %1832 = vmatpush1.msra.mxu0 0.0
      %1833 = vmatprep.subr.mxu0 0.0
      %1834 = vmatpush1.msra.mxu0 0.0
      %1835 = vmatprep.mubr.f32.mxu0 0.0
      %1836 = vmatmul.mubr.f32.gmra.mrb[0].mxu0 %v1769
      %v1837 = vpop.f32.mrb[0].mxu0
      %v1838 = vadd.f32 0.0, %v1837
      %v1839 = vpop.f32.mrb[0].mxu0
      %1840 = vdwg.mxu0
      %vm1841 = vcmask 24576
      %v1842 = vsel %vm1841, %v1838, -inf
      %1843 = vmax.xlane.f32.xlu0 %v1842
      %v1844 = vpop.xlane.xlu0 %1843
      %v1845 = vsub.f32 %v1838, %v1844
      %v1846 = vmul.f32 %v1845, 1.442695
      %v1847 = vpow.pop %v1846
      %v1848 = vsel %vm1841, %v1847, 0.0
      %1849 = vadd.xlane.f32.xlu0 %v1848
      %v1850 = vpop.xlane.xlu0 %1849
      %v1851 = vrcp.pop %v1850
      %v1852 = vmul.f32 %v1847, %v1851
      %v1854 = vsel %vm819, %v1852, 0
      %v1857 = vsel %vm819, %v815, 0
      %v1860 = vsel %vm819, %v816, 0
      %v1863 = vsel %vm819, %v817, 0
      %v1866 = vsel %vm819, %v818, 0
      %1868 = vmatprep.subr.mxu0 0.0
      %1869 = vmatpush1.xpose.msra.mxu0 %v1857
      %1870 = vmatprep.subr.mxu0 0.0
      %1871 = vmatpush1.xpose.msra.mxu0 %v1860
      %1872 = vmatprep.subr.mxu0 0.0
      %1873 = vmatpush1.xpose.msra.mxu0 %v1863
      %1874 = vmatprep.subr.mxu0 0.0
      %1875 = vmatpush1.xpose.msra.mxu0 %v1866
      %1876 = vmatprep.subr.mxu0 0.0
      %1877 = vmatpush1.xpose.msra.mxu0 0.0
      %1878 = vmatprep.subr.mxu0 0.0
      %1879 = vmatpush1.xpose.msra.mxu0 0.0
      %1880 = vmatprep.subr.mxu0 0.0
      %1881 = vmatpush1.xpose.msra.mxu0 0.0
      %1882 = vmatprep.subr.mxu0 0.0
      %1883 = vmatpush1.xpose.msra.mxu0 0.0
      %1884 = vmatprep.subr.mxu0 0.0
      %1885 = vmatpush1.xpose.msra.mxu0 0.0
      %1886 = vmatprep.subr.mxu0 0.0
      %1887 = vmatpush1.xpose.msra.mxu0 0.0
      %1888 = vmatprep.subr.mxu0 0.0
      %1889 = vmatpush1.xpose.msra.mxu0 0.0
      %1890 = vmatprep.subr.mxu0 0.0
      %1891 = vmatpush1.xpose.msra.mxu0 0.0
      %1892 = vmatprep.subr.mxu0 0.0
      %1893 = vmatpush1.xpose.msra.mxu0 0.0
      %1894 = vmatprep.subr.mxu0 0.0
      %1895 = vmatpush1.xpose.msra.mxu0 0.0
      %1896 = vmatprep.subr.mxu0 0.0
      %1897 = vmatpush1.xpose.msra.mxu0 0.0
      %1898 = vmatprep.subr.mxu0 0.0
      %1899 = vmatpush1.xpose.msra.mxu0 0.0
      %1900 = vmatprep.subr.mxu0 0.0
      %1901 = vmatpush1.xpose.msra.mxu0 0.0
      %1902 = vmatprep.subr.mxu0 0.0
      %1903 = vmatpush1.xpose.msra.mxu0 0.0
      %1904 = vmatprep.subr.mxu0 0.0
      %1905 = vmatpush1.xpose.msra.mxu0 0.0
      %1906 = vmatprep.subr.mxu0 0.0
      %1907 = vmatpush1.xpose.msra.mxu0 0.0
      %1908 = vmatprep.subr.mxu0 0.0
      %1909 = vmatpush1.xpose.msra.mxu0 0.0
      %1910 = vmatprep.subr.mxu0 0.0
      %1911 = vmatpush1.xpose.msra.mxu0 0.0
      %1912 = vmatprep.subr.mxu0 0.0
      %1913 = vmatpush1.xpose.msra.mxu0 0.0
      %1914 = vmatprep.subr.mxu0 0.0
      %1915 = vmatpush1.xpose.msra.mxu0 0.0
      %1916 = vmatprep.subr.mxu0 0.0
      %1917 = vmatpush1.xpose.msra.mxu0 0.0
      %1918 = vmatprep.subr.mxu0 0.0
      %1919 = vmatpush1.xpose.msra.mxu0 0.0
      %1920 = vmatprep.subr.mxu0 0.0
      %1921 = vmatpush1.xpose.msra.mxu0 0.0
      %1922 = vmatprep.subr.mxu0 0.0
      %1923 = vmatpush1.xpose.msra.mxu0 0.0
      %1924 = vmatprep.subr.mxu0 0.0
      %1925 = vmatpush1.xpose.msra.mxu0 0.0
      %1926 = vmatprep.subr.mxu0 0.0
      %1927 = vmatpush1.xpose.msra.mxu0 0.0
      %1928 = vmatprep.subr.mxu0 0.0
      %1929 = vmatpush1.xpose.msra.mxu0 0.0
      %1930 = vmatprep.subr.mxu0 0.0
      %1931 = vmatpush1.xpose.msra.mxu0 0.0
      %1932 = vmatprep.mubr.f32.mxu0 0.0
      %1933 = vmatmul.mubr.f32.gmra.mrb[0].mxu0 %v1854
      %v1934 = vpop.f32.mrb[0].mxu0
      %v1935 = vadd.f32 0.0, %v1934
      %v1936 = vpop.f32.mrb[0].mxu0
      %1937 = vdwg.mxu0
      %1938 = vmatprep.subr.mxu0 0.0
      %1939 = vmatpush1.msra.mxu0 %v833
      %1940 = vmatprep.subr.mxu0 0.0
      %1941 = vmatpush1.msra.mxu0 %v834
      %1942 = vmatprep.subr.mxu0 0.0
      %1943 = vmatpush1.msra.mxu0 %v835
      %1944 = vmatprep.subr.mxu0 0.0
      %1945 = vmatpush1.msra.mxu0 %v836
      %1946 = vmatprep.subr.mxu0 0.0
      %1947 = vmatpush1.msra.mxu0 0.0
      %1948 = vmatprep.subr.mxu0 0.0
      %1949 = vmatpush1.msra.mxu0 0.0
      %1950 = vmatprep.subr.mxu0 0.0
      %1951 = vmatpush1.msra.mxu0 0.0
      %1952 = vmatprep.subr.mxu0 0.0
      %1953 = vmatpush1.msra.mxu0 0.0
      %1954 = vmatprep.subr.mxu0 0.0
      %1955 = vmatpush1.msra.mxu0 0.0
      %1956 = vmatprep.subr.mxu0 0.0
      %1957 = vmatpush1.msra.mxu0 0.0
      %1958 = vmatprep.subr.mxu0 0.0
      %1959 = vmatpush1.msra.mxu0 0.0
      %1960 = vmatprep.subr.mxu0 0.0
      %1961 = vmatpush1.msra.mxu0 0.0
      %1962 = vmatprep.subr.mxu0 0.0
      %1963 = vmatpush1.msra.mxu0 0.0
      %1964 = vmatprep.subr.mxu0 0.0
      %1965 = vmatpush1.msra.mxu0 0.0
      %1966 = vmatprep.subr.mxu0 0.0
      %1967 = vmatpush1.msra.mxu0 0.0
      %1968 = vmatprep.subr.mxu0 0.0
      %1969 = vmatpush1.msra.mxu0 0.0
      %1970 = vmatprep.subr.mxu0 0.0
      %1971 = vmatpush1.msra.mxu0 0.0
      %1972 = vmatprep.subr.mxu0 0.0
      %1973 = vmatpush1.msra.mxu0 0.0
      %1974 = vmatprep.subr.mxu0 0.0
      %1975 = vmatpush1.msra.mxu0 0.0
      %1976 = vmatprep.subr.mxu0 0.0
      %1977 = vmatpush1.msra.mxu0 0.0
      %1978 = vmatprep.subr.mxu0 0.0
      %1979 = vmatpush1.msra.mxu0 0.0
      %1980 = vmatprep.subr.mxu0 0.0
      %1981 = vmatpush1.msra.mxu0 0.0
      %1982 = vmatprep.subr.mxu0 0.0
      %1983 = vmatpush1.msra.mxu0 0.0
      %1984 = vmatprep.subr.mxu0 0.0
      %1985 = vmatpush1.msra.mxu0 0.0
      %1986 = vmatprep.subr.mxu0 0.0
      %1987 = vmatpush1.msra.mxu0 0.0
      %1988 = vmatprep.subr.mxu0 0.0
      %1989 = vmatpush1.msra.mxu0 0.0
      %1990 = vmatprep.subr.mxu0 0.0
      %1991 = vmatpush1.msra.mxu0 0.0
      %1992 = vmatprep.subr.mxu0 0.0
      %1993 = vmatpush1.msra.mxu0 0.0
      %1994 = vmatprep.subr.mxu0 0.0
      %1995 = vmatpush1.msra.mxu0 0.0
      %1996 = vmatprep.subr.mxu0 0.0
      %1997 = vmatpush1.msra.mxu0 0.0
      %1998 = vmatprep.subr.mxu0 0.0
      %1999 = vmatpush1.msra.mxu0 0.0
      %2000 = vmatprep.subr.mxu0 0.0
      %2001 = vmatpush1.msra.mxu0 0.0
      %2002 = vmatprep.mubr.f32.mxu0 0.0
      %2003 = vmatmul.mubr.f32.gmra.mrb[0].mxu0 %v1769
      %v2004 = vpop.f32.mrb[0].mxu0
      %v2005 = vadd.f32 0.0, %v2004
      %v2006 = vpop.f32.mrb[0].mxu0
      %2007 = vdwg.mxu0
      %2009 = vset.pattern.permute.xlu0 0
      %2010 = vperm.xlu0 %2009, %v2005
      %v2011 = vpop.permute.xlu0 %2010
      %v2013 = vadd.f32 %v1838, %v2011
      %2015 = vrot.lane.b32.xlu0 %v1453, 32
      %v2016 = vpop.permute.xlu0 %2015
      %2019 = vrot.lane.b32.xlu0 %v1688, 64
      %v2020 = vpop.permute.xlu0 %2019
      %2023 = vrot.lane.b32.xlu0 %v1935, 96
      %v2024 = vpop.permute.xlu0 %2023
      %v2026 = vsel %vm717, %v1205, %v2016
      %v2027 = vsel %vm430, %v2026, %v2020
      %vm2028 = vcmask 785408
      %v2029 = vsel %vm2028, %v2027, %v2024
      %v2030 = vld [vmem:[%s1 + $0xa0] sm:$0xff]
      %v2031 = vld [vmem:[%s1 + $0xa8] sm:$0xff]
      %v2032 = vld [vmem:[%s1 + $0xb0] sm:$0xff]
      %v2033 = vld [vmem:[%s1 + $0xb8] sm:$0xff]
      %v2034 = vld [vmem:[%s1 + $0xc0] sm:$0xff]
      %v2035 = vld [vmem:[%s1 + $0xc8] sm:$0xff]
      %v2036 = vld [vmem:[%s1 + $0xd0] sm:$0xff]
      %v2037 = vld [vmem:[%s1 + $0xd8] sm:$0xff]
      %v2038 = vld [vmem:[%s1 + $0xe0] sm:$0xff]
      %v2039 = vld [vmem:[%s1 + $0xe8] sm:$0xff]
      %v2040 = vld [vmem:[%s1 + $0xf0] sm:$0xff]
      %v2041 = vld [vmem:[%s1 + $0xf8] sm:$0xff]
      %v2042 = vld [vmem:[%s1 + $0x100] sm:$0xff]
      %v2043 = vld [vmem:[%s1 + $0x108] sm:$0xff]
      %v2044 = vld [vmem:[%s1 + $0x110] sm:$0xff]
      %v2045 = vld [vmem:[%s1 + $0x118] sm:$0xff]
      %v2046 = vld [vmem:[%s1 + $0x120] sm:$0x1]
      %2047 = vmatprep.subr.mxu0 0.0
      %2048 = vmatpush1.msra.mxu0 %v2030
      %2049 = vmatprep.subr.mxu0 0.0
      %2050 = vmatpush1.msra.mxu0 %v2031
      %2051 = vmatprep.subr.mxu0 0.0
      %2052 = vmatpush1.msra.mxu0 %v2032
      %2053 = vmatprep.subr.mxu0 0.0
      %2054 = vmatpush1.msra.mxu0 %v2033
      %2055 = vmatprep.subr.mxu0 0.0
      %2056 = vmatpush1.msra.mxu0 %v2034
      %2057 = vmatprep.subr.mxu0 0.0
      %2058 = vmatpush1.msra.mxu0 %v2035
      %2059 = vmatprep.subr.mxu0 0.0
      %2060 = vmatpush1.msra.mxu0 %v2036
      %2061 = vmatprep.subr.mxu0 0.0
      %2062 = vmatpush1.msra.mxu0 %v2037
      %2063 = vmatprep.subr.mxu0 0.0
      %2064 = vmatpush1.msra.mxu0 %v2038
      %2065 = vmatprep.subr.mxu0 0.0
      %2066 = vmatpush1.msra.mxu0 %v2039
      %2067 = vmatprep.subr.mxu0 0.0
      %2068 = vmatpush1.msra.mxu0 %v2040
      %2069 = vmatprep.subr.mxu0 0.0
      %2070 = vmatpush1.msra.mxu0 %v2041
      %2071 = vmatprep.subr.mxu0 0.0
      %2072 = vmatpush1.msra.mxu0 %v2042
      %2073 = vmatprep.subr.mxu0 0.0
      %2074 = vmatpush1.msra.mxu0 %v2043
      %2075 = vmatprep.subr.mxu0 0.0
      %2076 = vmatpush1.msra.mxu0 %v2044
      %2077 = vmatprep.subr.mxu0 0.0
      %2078 = vmatpush1.msra.mxu0 %v2045
      %2079 = vmatprep.subr.mxu0 0.0
      %2080 = vmatpush1.msra.mxu0 0.0
      %2081 = vmatprep.subr.mxu0 0.0
      %2082 = vmatpush1.msra.mxu0 0.0
      %2083 = vmatprep.subr.mxu0 0.0
      %2084 = vmatpush1.msra.mxu0 0.0
      %2085 = vmatprep.subr.mxu0 0.0
      %2086 = vmatpush1.msra.mxu0 0.0
      %2087 = vmatprep.subr.mxu0 0.0
      %2088 = vmatpush1.msra.mxu0 0.0
      %2089 = vmatprep.subr.mxu0 0.0
      %2090 = vmatpush1.msra.mxu0 0.0
      %2091 = vmatprep.subr.mxu0 0.0
      %2092 = vmatpush1.msra.mxu0 0.0
      %2093 = vmatprep.subr.mxu0 0.0
      %2094 = vmatpush1.msra.mxu0 0.0
      %2095 = vmatprep.subr.mxu0 0.0
      %2096 = vmatpush1.msra.mxu0 0.0
      %2097 = vmatprep.subr.mxu0 0.0
      %2098 = vmatpush1.msra.mxu0 0.0
      %2099 = vmatprep.subr.mxu0 0.0
      %2100 = vmatpush1.msra.mxu0 0.0
      %2101 = vmatprep.subr.mxu0 0.0
      %2102 = vmatpush1.msra.mxu0 0.0
      %2103 = vmatprep.subr.mxu0 0.0
      %2104 = vmatpush1.msra.mxu0 0.0
      %2105 = vmatprep.subr.mxu0 0.0
      %2106 = vmatpush1.msra.mxu0 0.0
      %2107 = vmatprep.subr.mxu0 0.0
      %2108 = vmatpush1.msra.mxu0 0.0
      %2109 = vmatprep.subr.mxu0 0.0
      %2110 = vmatpush1.msra.mxu0 0.0
      %2111 = vmatprep.mubr.f32.mxu0 0.0
      %2112 = vmatmul.mubr.f32.gmra.mrb[0].mxu0 %v2029
      %v2113 = vpop.f32.mrb[0].mxu0
      %v2114 = vadd.f32 %v2046, %v2113
      %v2115 = vpop.f32.mrb[0].mxu0
      %2116 = vdwg.mxu0
      %v2117 = vmax.f32 %v2114, 0.0
      %v2118 = vld [vmem:[%s1 + $0x128] sm:$0xff]
      %v2119 = vld [vmem:[%s1 + $0x130] sm:$0xff]
      %v2120 = vld [vmem:[%s1 + $0x138] sm:$0xff]
      %v2121 = vld [vmem:[%s1 + $0x140] sm:$0xff]
      %v2122 = vld [vmem:[%s1 + $0x148] sm:$0x1]
      %v2124 = vsel %vm717, %v2117, 0
      %2126 = vmatprep.subr.mxu0 0.0
      %2127 = vmatpush1.msra.mxu0 %v2118
      %2128 = vmatprep.subr.mxu0 0.0
      %2129 = vmatpush1.msra.mxu0 %v2119
      %2130 = vmatprep.subr.mxu0 0.0
      %2131 = vmatpush1.msra.mxu0 %v2120
      %2132 = vmatprep.subr.mxu0 0.0
      %2133 = vmatpush1.msra.mxu0 %v2121
      %2134 = vmatprep.subr.mxu0 0.0
      %2135 = vmatpush1.msra.mxu0 0.0
      %2136 = vmatprep.subr.mxu0 0.0
      %2137 = vmatpush1.msra.mxu0 0.0
      %2138 = vmatprep.subr.mxu0 0.0
      %2139 = vmatpush1.msra.mxu0 0.0
      %2140 = vmatprep.subr.mxu0 0.0
      %2141 = vmatpush1.msra.mxu0 0.0
      %2142 = vmatprep.subr.mxu0 0.0
      %2143 = vmatpush1.msra.mxu0 0.0
      %2144 = vmatprep.subr.mxu0 0.0
      %2145 = vmatpush1.msra.mxu0 0.0
      %2146 = vmatprep.subr.mxu0 0.0
      %2147 = vmatpush1.msra.mxu0 0.0
      %2148 = vmatprep.subr.mxu0 0.0
      %2149 = vmatpush1.msra.mxu0 0.0
      %2150 = vmatprep.subr.mxu0 0.0
      %2151 = vmatpush1.msra.mxu0 0.0
      %2152 = vmatprep.subr.mxu0 0.0
      %2153 = vmatpush1.msra.mxu0 0.0
      %2154 = vmatprep.subr.mxu0 0.0
      %2155 = vmatpush1.msra.mxu0 0.0
      %2156 = vmatprep.subr.mxu0 0.0
      %2157 = vmatpush1.msra.mxu0 0.0
      %2158 = vmatprep.subr.mxu0 0.0
      %2159 = vmatpush1.msra.mxu0 0.0
      %2160 = vmatprep.subr.mxu0 0.0
      %2161 = vmatpush1.msra.mxu0 0.0
      %2162 = vmatprep.subr.mxu0 0.0
      %2163 = vmatpush1.msra.mxu0 0.0
      %2164 = vmatprep.subr.mxu0 0.0
      %2165 = vmatpush1.msra.mxu0 0.0
      %2166 = vmatprep.subr.mxu0 0.0
      %2167 = vmatpush1.msra.mxu0 0.0
      %2168 = vmatprep.subr.mxu0 0.0
      %2169 = vmatpush1.msra.mxu0 0.0
      %2170 = vmatprep.subr.mxu0 0.0
      %2171 = vmatpush1.msra.mxu0 0.0
      %2172 = vmatprep.subr.mxu0 0.0
      %2173 = vmatpush1.msra.mxu0 0.0
      %2174 = vmatprep.subr.mxu0 0.0
      %2175 = vmatpush1.msra.mxu0 0.0
      %2176 = vmatprep.subr.mxu0 0.0
      %2177 = vmatpush1.msra.mxu0 0.0
      %2178 = vmatprep.subr.mxu0 0.0
      %2179 = vmatpush1.msra.mxu0 0.0
      %2180 = vmatprep.subr.mxu0 0.0
      %2181 = vmatpush1.msra.mxu0 0.0
      %2182 = vmatprep.subr.mxu0 0.0
      %2183 = vmatpush1.msra.mxu0 0.0
      %2184 = vmatprep.subr.mxu0 0.0
      %2185 = vmatpush1.msra.mxu0 0.0
      %2186 = vmatprep.subr.mxu0 0.0
      %2187 = vmatpush1.msra.mxu0 0.0
      %2188 = vmatprep.subr.mxu0 0.0
      %2189 = vmatpush1.msra.mxu0 0.0
      %2190 = vmatprep.mubr.f32.mxu0 0.0
      %2191 = vmatmul.mubr.f32.gmra.mrb[0].mxu0 %v2124
      %v2192 = vpop.f32.mrb[0].mxu0
      %v2193 = vadd.f32 %v2122, %v2192
      %v2194 = vpop.f32.mrb[0].mxu0
      %2195 = vdwg.mxu0
      %v2196 = vsel %vm430, %v1531, 0.0
      %v2197 = vsel %vm512, %v1766, 0.0
      %v2198 = vsel %vm819, %v2013, 0.0
      %v2201 = vrot.slane %v1283, 7
      %v2202 = vrot.slane %v1284, 7
      %v2207 = vrot.slane %v2196, 6
      %v2208 = vrot.slane 0.0, 6
      %v2212 = vrot.slane %v2197, 5
      %v2213 = vrot.slane 0.0, 5
      %v2217 = vrot.slane %v2198, 4
      %v2218 = vrot.slane 0.0, 4
      %v2221 = vsel %vm1118, %v2193, %v2201
      %v2222 = vsel %vm1118, 0.0, %v2202
      %vm2223 = vcmask 1041408
      %v2224 = vsel %vm2223, %v2221, %v2207
      %v2225 = vsel %vm2223, %v2222, %v2208
      %v2226 = vsel %vm152, %v2224, %v2212
      %v2227 = vsel %vm152, %v2225, %v2213
      %vm2228 = vcmask 1043456
      %v2229 = vsel %vm2228, %v2226, %v2217
      %v2230 = vsel %vm2228, %v2227, %v2218
      %vm2231 = vcmask 1044480
      %v2232 = vsel %vm2231, %v2229, 0.0
      %v2233 = vsel %vm2231, %v2230, 0.0
      %2234 = vst [vmem:[%s143] sm:$0xff] %v2232
      %2235 = vst [vmem:[%s143 + $0x8] sm:$0xff] %v2233
      %p2236 = scmp.lt.s32.totalorder %s13, 1
      %s2237 = scalar_select %p2236, %s13, 1
      %s2238 = smul.addr %s2237, 2
      %s2239 = smul.addr %s2238, 8
      %s2240 = scalar_lea.vmem %s2, %s2239
      // Predicated region
      $region29: #{attn_resnet_forward.1} parent=27 // pred_check
        %p2241 = pneg %p78
      $region30: #{attn_resnet_forward.1} parent=27 // pred_check_branch
        %2243 = sbr.rel (%p2241) target = $region32
      $region31: #{attn_resnet_forward.1} parent=27 // pred_region
        _
      $region32: #{attn_resnet_forward.1} parent=27 // pred_fallthru
        _
    $region28: #{attn_resnet_forward.1} parent=5 // pred_fallthru
      _
    %p2244 = scmp.le.s32.totalorder 2, %s8
    // Predicated region
    $region33: #{attn_resnet_forward.1} parent=5 // pred_check
      %p2245 = pneg %p2244
    $region34: #{attn_resnet_forward.1} parent=5 // pred_check_branch
      %2247 = sbr.rel (%p2245) target = $region36
    $region35: #{attn_resnet_forward.1} parent=5 // pred_region
      %s2248 = ssub.s32 %s8, 2
      // Predicated region
      $region37: #{attn_resnet_forward.1} parent=35 // pred_check
        %p2249 = pneg %p84
      $region38: #{attn_resnet_forward.1} parent=35 // pred_check_branch
        %2251 = sbr.rel (%p2249) target = $region40
      $region39: #{attn_resnet_forward.1} parent=35 // pred_region
        %p2252 = scmp.lt.s32.totalorder %s14, 1
        %s2253 = scalar_select %p2252, %s14, 1
        %s2254 = smul.addr %s2253, 2
        %s2255 = smul.addr %s2254, 8
        %s2256 = scalar_lea.vmem %s2, %s2255
      $region40: #{attn_resnet_forward.1} parent=35 // pred_fallthru
        _
    $region36: #{attn_resnet_forward.1} parent=5 // pred_fallthru
      _
  $region6: #{attn_resnet_forward.1} parent=0 // loop_footer
    %s12 = sadd.s32 1, %s8
  $region7: #{attn_resnet_forward.1} parent=0 // loop_footer_branch
    %7 = sbr.rel target = $region3
  $region8: #{attn_resnet_forward.1} parent=0 // loop_exit
    _

</llo_original>
